<compile_context>
chip_gen: v7x
topology: tpu7x:2x2x1
jax: 0.10.0
libtpu: 0.0.40
codegen_flags: <defaults>
</compile_context>

<pallas_src>
import jax
import jax.numpy as jnp
from jax.experimental import pallas as pl
from jax.experimental.pallas import tpu as pltpu

# ---------------- configuration (small, consistent with the module) -----------
B = 2            # batch
D = 32           # input_dim
H = 4            # num_heads
DH = D // H      # dim_head = 8
NUM_Q = 8        # num_q == query sequence length (required by q_aware einsum)
N = NUM_Q        # seq length (context == x, so Nc == Nq == num_q)
R = 8            # q_aware_to_v_lora_rank
M = NUM_Q * R    # all_q_mid = 64
LN_EPS = 1e-5


# ------------------------------- fused kernel ----------------------------------
def fused_kernel(x_ref, wqkv_ref, gamma_ref, beta_ref, wcbd_ref, wout_ref, o_ref):
    x = x_ref[0]                                                       # (N, D)

    # --- fused q/k/v1 projection: one 128-lane matmul, static-slice the result ---
    qkv = jnp.dot(x, wqkv_ref[...], preferred_element_type=jnp.float32)  # (N, 2D+M)
    q = qkv[:, :D]                                                     # (N, D)
    k = qkv[:, D:2 * D]                                                # (N, D)
    v1 = qkv[:, 2 * D:]                                                # (N, M)

    # --- LayerNorm over M (to_v[1]) ---
    mu = jnp.mean(v1, axis=-1, keepdims=True)
    var = jnp.mean((v1 - mu) ** 2, axis=-1, keepdims=True)
    v1n = (v1 - mu) * jax.lax.rsqrt(var + LN_EPS)
    v1n = v1n * gamma_ref[...] + beta_ref[...]                         # (N, M)

    # --- grouped 1x1 conv == block-diagonal matmul: (N, M) @ (M, NUM_Q*D) ---
    v_all = jnp.dot(v1n, wcbd_ref[...],
                    preferred_element_type=jnp.float32)                # (N, NUM_Q*D)
    v3 = v_all.reshape(N, NUM_Q, D)                                    # (j_ctx, i_q, d)

    # --- attention: all H heads in this program, static lane slices ---
    scale = DH ** -0.5
    outs = []
    for h in range(H):
        qh = q[:, h * DH:(h + 1) * DH]                                 # (N, DH)
        kh = k[:, h * DH:(h + 1) * DH]                                 # (N, DH)
        sim = jax.lax.dot_general(qh, kh, (((1,), (1,)), ((), ())),
                                  preferred_element_type=jnp.float32) * scale
        sim = sim - jnp.max(sim, axis=-1, keepdims=True)
        p = jnp.exp(sim)
        attn = p * pl.reciprocal(jnp.sum(p, axis=-1, keepdims=True),
                                 approx=True)                          # (Nq, Nk)

        # q-aware values: out_h[i, d] = sum_j attn[i, j] * v3[j, i, h*DH + d]
        v3h = v3[:, :, h * DH:(h + 1) * DH]                            # (j, i, DH)
        out_h = jnp.sum(attn.T[:, :, None] * v3h, axis=0)              # (i, DH)
        outs.append(out_h)

    merged = jnp.concatenate(outs, axis=-1)                            # (N, D)

    # --- to_out linear ---
    o_ref[0] = jnp.dot(merged, wout_ref[...],
                       preferred_element_type=jnp.float32)


# ------------------------------ wrapper ----------------------------------------
def cross_attention_pallas(x, wq_t, wk_t, wv1_t, gamma, beta, wc_t, wout_t):
    # host-side weight prep (constant-folded under jit):
    #   * one fused qkv projection slab, exactly 128 lanes wide
    #   * block-diagonal expansion of the grouped 1x1 conv weight
    w_qkv = jnp.concatenate([wq_t, wk_t, wv1_t], axis=1)               # (D, 2D+M)
    w_cbd = jnp.zeros((M, NUM_Q * D), jnp.float32)
    for qi in range(NUM_Q):
        w_cbd = w_cbd.at[qi * R:(qi + 1) * R, qi * D:(qi + 1) * D].set(wc_t[qi])

    return pl.pallas_call(
        fused_kernel,
        out_shape=jax.ShapeDtypeStruct((B, N, D), jnp.float32),
        grid=(B,),
        in_specs=[pl.BlockSpec((1, N, D), lambda b: (b, 0, 0)),
                  pl.BlockSpec((D, 2 * D + M), lambda b: (0, 0)),
                  pl.BlockSpec((1, M), lambda b: (0, 0)),
                  pl.BlockSpec((1, M), lambda b: (0, 0)),
                  pl.BlockSpec((M, NUM_Q * D), lambda b: (0, 0)),
                  pl.BlockSpec((D, D), lambda b: (0, 0))],
        out_specs=pl.BlockSpec((1, N, D), lambda b: (b, 0, 0)),
        compiler_params=pltpu.CompilerParams(dimension_semantics=("parallel",)),
    )(x, w_qkv, gamma, beta, w_cbd, wout_t)


# ------------------------- pure-JAX reference (for checking) -------------------
def cross_attention_ref(x, wq_t, wk_t, wv1_t, gamma, beta, wc_t, wout_t):
    q = x @ wq_t
    k = x @ wk_t
    v1 = x @ wv1_t                                                     # (B, N, M)
    mu = v1.mean(-1, keepdims=True)
    var = ((v1 - mu) ** 2).mean(-1, keepdims=True)
    v1n = (v1 - mu) / jnp.sqrt(var + LN_EPS) * gamma[0] + beta[0]
    v = jnp.einsum('bnqr,qrd->bqnd', v1n.reshape(B, N, NUM_Q, R), wc_t)

    qh = q.reshape(B, N, H, DH).transpose(0, 2, 1, 3).reshape(B * H, N, DH)
    kh = k.reshape(B, N, H, DH).transpose(0, 2, 1, 3).reshape(B * H, N, DH)
    vh = v.reshape(B, NUM_Q, N, H, DH).transpose(0, 3, 1, 2, 4) \
          .reshape(B * H, NUM_Q, N, DH)

    scale = DH ** -0.25
    sim = jnp.einsum('bid,bjd->bij', qh * scale, kh * scale)
    attn = jax.nn.softmax(sim, axis=-1)
    out = jnp.einsum('bij,bijd->bid', attn, vh)
    out = out.reshape(B, H, N, DH).transpose(0, 2, 1, 3).reshape(B, N, D)
    return out @ wout_t


# ---------------------------------- main ---------------------------------------
if __name__ == "__main__":
    key = jax.random.PRNGKey(0)
    ks = jax.random.split(key, 8)
    s = 0.1
    # weights stored pre-transposed (in_features, out_features) so kernels do x @ W
    wq_t = s * jax.random.normal(ks[0], (D, D), jnp.float32)
    wk_t = s * jax.random.normal(ks[1], (D, D), jnp.float32)
    wv1_t = s * jax.random.normal(ks[2], (D, M), jnp.float32)
    gamma = 1.0 + 0.1 * jax.random.normal(ks[3], (1, M), jnp.float32)
    beta = 0.1 * jax.random.normal(ks[4], (1, M), jnp.float32)
    # grouped Conv1d weight (num_q*D, R, 1) stored as (num_q, R, D)
    wc_t = s * jax.random.normal(ks[5], (NUM_Q, R, D), jnp.float32)
    wout_t = s * jax.random.normal(ks[6], (D, D), jnp.float32)

    x = jax.random.normal(ks[7], (B, N, D), jnp.float32)

    out = cross_attention_pallas(x, wq_t, wk_t, wv1_t, gamma, beta, wc_t, wout_t)
    out = jax.block_until_ready(out)

    ref = cross_attention_ref(x, wq_t, wk_t, wv1_t, gamma, beta, wc_t, wout_t)
    assert out.shape == (B, N, D), out.shape
    assert bool(jnp.allclose(out, ref, rtol=2e-2, atol=2e-3)), "mismatch vs reference"

    print("KERNEL_OK")
</pallas_src>

<mosaic_0001>
module attributes {stable_mosaic.version = 11 : i64} {
  func.func @fused_kernel(%arg0: i32, %arg1: memref<1x8x32xf32, #tpu.memory_space<vmem>>, %arg2: memref<32x128xf32, #tpu.memory_space<vmem>>, %arg3: memref<1x64xf32, #tpu.memory_space<vmem>>, %arg4: memref<1x64xf32, #tpu.memory_space<vmem>>, %arg5: memref<64x256xf32, #tpu.memory_space<vmem>>, %arg6: memref<32x32xf32, #tpu.memory_space<vmem>>, %arg7: memref<1x8x32xf32, #tpu.memory_space<vmem>>) attributes {dimension_semantics = [#tpu.dimension_semantics<parallel>], iteration_bounds = array<i64: 2>, scalar_prefetch = 0 : i64, scratch_operands = 0 : i64, tpu.core_type = #tpu.core_type<tc>, window_params = [{transform_indices = @transform_0, window_bounds = array<i64: 1, 8, 32>}, {pipeline_mode = #tpu.pipeline_mode<synchronous>, transform_indices = @transform_1, window_bounds = array<i64: 32, 128>}, {pipeline_mode = #tpu.pipeline_mode<synchronous>, transform_indices = @transform_2, window_bounds = array<i64: 1, 64>}, {pipeline_mode = #tpu.pipeline_mode<synchronous>, transform_indices = @transform_3, window_bounds = array<i64: 1, 64>}, {pipeline_mode = #tpu.pipeline_mode<synchronous>, transform_indices = @transform_4, window_bounds = array<i64: 64, 256>}, {pipeline_mode = #tpu.pipeline_mode<synchronous>, transform_indices = @transform_5, window_bounds = array<i64: 32, 32>}, {transform_indices = @transform_6, window_bounds = array<i64: 1, 8, 32>}]} {
    %c0 = arith.constant 0 : index
    %c0_0 = arith.constant 0 : index
    %c0_1 = arith.constant 0 : index
    %0 = vector.load %arg1[%c0, %c0_0, %c0_1] : memref<1x8x32xf32, #tpu.memory_space<vmem>>, vector<1x8x32xf32>
    %1 = vector.shape_cast %0 : vector<1x8x32xf32> to vector<8x32xf32>
    %c0_2 = arith.constant 0 : index
    %c0_3 = arith.constant 0 : index
    %2 = vector.load %arg2[%c0_2, %c0_3] : memref<32x128xf32, #tpu.memory_space<vmem>>, vector<32x128xf32>
    %cst = arith.constant dense<0.000000e+00> : vector<8x128xf32>
    %3 = tpu.matmul %1, %2, %cst {dimension_numbers = #tpu.dot_dimension_numbers<[1], [0], [0], [1], [0, 0, 1, 1], [], []>} : vector<8x32xf32>, vector<32x128xf32>, vector<8x128xf32> -> vector<8x128xf32>
    %4 = vector.extract_strided_slice %3 {offsets = [0, 0], sizes = [8, 32], strides = [1, 1]} : vector<8x128xf32> to vector<8x32xf32>
    %5 = vector.extract_strided_slice %3 {offsets = [0, 32], sizes = [8, 32], strides = [1, 1]} : vector<8x128xf32> to vector<8x32xf32>
    %6 = vector.extract_strided_slice %3 {offsets = [0, 64], sizes = [8, 64], strides = [1, 1]} : vector<8x128xf32> to vector<8x64xf32>
    %cst_4 = arith.constant dense<0.000000e+00> : vector<8xf32>
    %7 = vector.multi_reduction <add>, %6, %cst_4 [1] : vector<8x64xf32> to vector<8xf32>
    %8 = vector.shape_cast %7 : vector<8xf32> to vector<8x1xf32>
    %cst_5 = arith.constant 6.400000e+01 : f32
    %9 = vector.broadcast %cst_5 : f32 to vector<8x1xf32>
    %10 = arith.divf %8, %9 : vector<8x1xf32>
    %11 = vector.broadcast %10 : vector<8x1xf32> to vector<8x64xf32>
    %12 = arith.subf %6, %11 : vector<8x64xf32>
    %13 = arith.mulf %12, %12 : vector<8x64xf32>
    %cst_6 = arith.constant dense<0.000000e+00> : vector<8xf32>
    %14 = vector.multi_reduction <add>, %13, %cst_6 [1] : vector<8x64xf32> to vector<8xf32>
    %15 = vector.shape_cast %14 : vector<8xf32> to vector<8x1xf32>
    %cst_7 = arith.constant 6.400000e+01 : f32
    %16 = vector.broadcast %cst_7 : f32 to vector<8x1xf32>
    %17 = arith.divf %15, %16 : vector<8x1xf32>
    %18 = vector.broadcast %10 : vector<8x1xf32> to vector<8x64xf32>
    %19 = arith.subf %6, %18 : vector<8x64xf32>
    %cst_8 = arith.constant 9.99999974E-6 : f32
    %20 = vector.broadcast %cst_8 : f32 to vector<8x1xf32>
    %21 = arith.addf %17, %20 : vector<8x1xf32>
    %22 = math.rsqrt %21 : vector<8x1xf32>
    %23 = vector.broadcast %22 : vector<8x1xf32> to vector<8x64xf32>
    %24 = arith.mulf %19, %23 : vector<8x64xf32>
    %c0_9 = arith.constant 0 : index
    %c0_10 = arith.constant 0 : index
    %25 = vector.load %arg3[%c0_9, %c0_10] : memref<1x64xf32, #tpu.memory_space<vmem>>, vector<1x64xf32>
    %26 = vector.broadcast %25 : vector<1x64xf32> to vector<8x64xf32>
    %27 = arith.mulf %24, %26 : vector<8x64xf32>
    %c0_11 = arith.constant 0 : index
    %c0_12 = arith.constant 0 : index
    %28 = vector.load %arg4[%c0_11, %c0_12] : memref<1x64xf32, #tpu.memory_space<vmem>>, vector<1x64xf32>
    %29 = vector.broadcast %28 : vector<1x64xf32> to vector<8x64xf32>
    %30 = arith.addf %27, %29 : vector<8x64xf32>
    %c0_13 = arith.constant 0 : index
    %c0_14 = arith.constant 0 : index
    %31 = vector.load %arg5[%c0_13, %c0_14] : memref<64x256xf32, #tpu.memory_space<vmem>>, vector<64x256xf32>
    %cst_15 = arith.constant dense<0.000000e+00> : vector<8x256xf32>
    %32 = tpu.matmul %30, %31, %cst_15 {dimension_numbers = #tpu.dot_dimension_numbers<[1], [0], [0], [1], [0, 0, 1, 1], [], []>} : vector<8x64xf32>, vector<64x256xf32>, vector<8x256xf32> -> vector<8x256xf32>
    %33 = vector.shape_cast %32 : vector<8x256xf32> to vector<8x8x32xf32>
    %34 = vector.extract_strided_slice %4 {offsets = [0, 0], sizes = [8, 8], strides = [1, 1]} : vector<8x32xf32> to vector<8x8xf32>
    %35 = vector.extract_strided_slice %5 {offsets = [0, 0], sizes = [8, 8], strides = [1, 1]} : vector<8x32xf32> to vector<8x8xf32>
    %cst_16 = arith.constant dense<0.000000e+00> : vector<8x8xf32>
    %36 = tpu.matmul %34, %35, %cst_16 {dimension_numbers = #tpu.dot_dimension_numbers<[1], [1], [0], [0], [0, 0, 1, 0], [], []>} : vector<8x8xf32>, vector<8x8xf32>, vector<8x8xf32> -> vector<8x8xf32>
    %cst_17 = arith.constant 0.353553385 : f32
    %37 = vector.broadcast %cst_17 : f32 to vector<8x8xf32>
    %38 = arith.mulf %36, %37 : vector<8x8xf32>
    %cst_18 = arith.constant dense<0xFF800000> : vector<8xf32>
    %39 = vector.multi_reduction <maximumf>, %38, %cst_18 [1] : vector<8x8xf32> to vector<8xf32>
    %40 = vector.shape_cast %39 : vector<8xf32> to vector<8x1xf32>
    %41 = vector.broadcast %40 : vector<8x1xf32> to vector<8x8xf32>
    %42 = arith.subf %38, %41 : vector<8x8xf32>
    %43 = math.exp %42 : vector<8x8xf32>
    %cst_19 = arith.constant dense<0.000000e+00> : vector<8xf32>
    %44 = vector.multi_reduction <add>, %43, %cst_19 [1] : vector<8x8xf32> to vector<8xf32>
    %45 = vector.shape_cast %44 : vector<8xf32> to vector<8x1xf32>
    %46 = tpu.reciprocal %45 {approx = true} : vector<8x1xf32> -> vector<8x1xf32>
    %47 = vector.broadcast %46 : vector<8x1xf32> to vector<8x8xf32>
    %48 = arith.mulf %43, %47 : vector<8x8xf32>
    %49 = vector.extract_strided_slice %33 {offsets = [0, 0, 0], sizes = [8, 8, 8], strides = [1, 1, 1]} : vector<8x8x32xf32> to vector<8x8x8xf32>
    %50 = tpu.transpose %48, [1, 0] : vector<8x8xf32> -> vector<8x8xf32>
    %51 = vector.shape_cast %50 : vector<8x8xf32> to vector<8x8x1xf32>
    %52 = vector.broadcast %51 : vector<8x8x1xf32> to vector<8x8x8xf32>
    %53 = arith.mulf %52, %49 : vector<8x8x8xf32>
    %cst_20 = arith.constant dense<0.000000e+00> : vector<8x8xf32>
    %54 = vector.multi_reduction <add>, %53, %cst_20 [0] : vector<8x8x8xf32> to vector<8x8xf32>
    %55 = vector.extract_strided_slice %4 {offsets = [0, 8], sizes = [8, 8], strides = [1, 1]} : vector<8x32xf32> to vector<8x8xf32>
    %56 = vector.extract_strided_slice %5 {offsets = [0, 8], sizes = [8, 8], strides = [1, 1]} : vector<8x32xf32> to vector<8x8xf32>
    %cst_21 = arith.constant dense<0.000000e+00> : vector<8x8xf32>
    %57 = tpu.matmul %55, %56, %cst_21 {dimension_numbers = #tpu.dot_dimension_numbers<[1], [1], [0], [0], [0, 0, 1, 0], [], []>} : vector<8x8xf32>, vector<8x8xf32>, vector<8x8xf32> -> vector<8x8xf32>
    %cst_22 = arith.constant 0.353553385 : f32
    %58 = vector.broadcast %cst_22 : f32 to vector<8x8xf32>
    %59 = arith.mulf %57, %58 : vector<8x8xf32>
    %cst_23 = arith.constant dense<0xFF800000> : vector<8xf32>
    %60 = vector.multi_reduction <maximumf>, %59, %cst_23 [1] : vector<8x8xf32> to vector<8xf32>
    %61 = vector.shape_cast %60 : vector<8xf32> to vector<8x1xf32>
    %62 = vector.broadcast %61 : vector<8x1xf32> to vector<8x8xf32>
    %63 = arith.subf %59, %62 : vector<8x8xf32>
    %64 = math.exp %63 : vector<8x8xf32>
    %cst_24 = arith.constant dense<0.000000e+00> : vector<8xf32>
    %65 = vector.multi_reduction <add>, %64, %cst_24 [1] : vector<8x8xf32> to vector<8xf32>
    %66 = vector.shape_cast %65 : vector<8xf32> to vector<8x1xf32>
    %67 = tpu.reciprocal %66 {approx = true} : vector<8x1xf32> -> vector<8x1xf32>
    %68 = vector.broadcast %67 : vector<8x1xf32> to vector<8x8xf32>
    %69 = arith.mulf %64, %68 : vector<8x8xf32>
    %70 = vector.extract_strided_slice %33 {offsets = [0, 0, 8], sizes = [8, 8, 8], strides = [1, 1, 1]} : vector<8x8x32xf32> to vector<8x8x8xf32>
    %71 = tpu.transpose %69, [1, 0] : vector<8x8xf32> -> vector<8x8xf32>
    %72 = vector.shape_cast %71 : vector<8x8xf32> to vector<8x8x1xf32>
    %73 = vector.broadcast %72 : vector<8x8x1xf32> to vector<8x8x8xf32>
    %74 = arith.mulf %73, %70 : vector<8x8x8xf32>
    %cst_25 = arith.constant dense<0.000000e+00> : vector<8x8xf32>
    %75 = vector.multi_reduction <add>, %74, %cst_25 [0] : vector<8x8x8xf32> to vector<8x8xf32>
    %76 = vector.extract_strided_slice %4 {offsets = [0, 16], sizes = [8, 8], strides = [1, 1]} : vector<8x32xf32> to vector<8x8xf32>
    %77 = vector.extract_strided_slice %5 {offsets = [0, 16], sizes = [8, 8], strides = [1, 1]} : vector<8x32xf32> to vector<8x8xf32>
    %cst_26 = arith.constant dense<0.000000e+00> : vector<8x8xf32>
    %78 = tpu.matmul %76, %77, %cst_26 {dimension_numbers = #tpu.dot_dimension_numbers<[1], [1], [0], [0], [0, 0, 1, 0], [], []>} : vector<8x8xf32>, vector<8x8xf32>, vector<8x8xf32> -> vector<8x8xf32>
    %cst_27 = arith.constant 0.353553385 : f32
    %79 = vector.broadcast %cst_27 : f32 to vector<8x8xf32>
    %80 = arith.mulf %78, %79 : vector<8x8xf32>
    %cst_28 = arith.constant dense<0xFF800000> : vector<8xf32>
    %81 = vector.multi_reduction <maximumf>, %80, %cst_28 [1] : vector<8x8xf32> to vector<8xf32>
    %82 = vector.shape_cast %81 : vector<8xf32> to vector<8x1xf32>
    %83 = vector.broadcast %82 : vector<8x1xf32> to vector<8x8xf32>
    %84 = arith.subf %80, %83 : vector<8x8xf32>
    %85 = math.exp %84 : vector<8x8xf32>
    %cst_29 = arith.constant dense<0.000000e+00> : vector<8xf32>
    %86 = vector.multi_reduction <add>, %85, %cst_29 [1] : vector<8x8xf32> to vector<8xf32>
    %87 = vector.shape_cast %86 : vector<8xf32> to vector<8x1xf32>
    %88 = tpu.reciprocal %87 {approx = true} : vector<8x1xf32> -> vector<8x1xf32>
    %89 = vector.broadcast %88 : vector<8x1xf32> to vector<8x8xf32>
    %90 = arith.mulf %85, %89 : vector<8x8xf32>
    %91 = vector.extract_strided_slice %33 {offsets = [0, 0, 16], sizes = [8, 8, 8], strides = [1, 1, 1]} : vector<8x8x32xf32> to vector<8x8x8xf32>
    %92 = tpu.transpose %90, [1, 0] : vector<8x8xf32> -> vector<8x8xf32>
    %93 = vector.shape_cast %92 : vector<8x8xf32> to vector<8x8x1xf32>
    %94 = vector.broadcast %93 : vector<8x8x1xf32> to vector<8x8x8xf32>
    %95 = arith.mulf %94, %91 : vector<8x8x8xf32>
    %cst_30 = arith.constant dense<0.000000e+00> : vector<8x8xf32>
    %96 = vector.multi_reduction <add>, %95, %cst_30 [0] : vector<8x8x8xf32> to vector<8x8xf32>
    %97 = vector.extract_strided_slice %4 {offsets = [0, 24], sizes = [8, 8], strides = [1, 1]} : vector<8x32xf32> to vector<8x8xf32>
    %98 = vector.extract_strided_slice %5 {offsets = [0, 24], sizes = [8, 8], strides = [1, 1]} : vector<8x32xf32> to vector<8x8xf32>
    %cst_31 = arith.constant dense<0.000000e+00> : vector<8x8xf32>
    %99 = tpu.matmul %97, %98, %cst_31 {dimension_numbers = #tpu.dot_dimension_numbers<[1], [1], [0], [0], [0, 0, 1, 0], [], []>} : vector<8x8xf32>, vector<8x8xf32>, vector<8x8xf32> -> vector<8x8xf32>
    %cst_32 = arith.constant 0.353553385 : f32
    %100 = vector.broadcast %cst_32 : f32 to vector<8x8xf32>
    %101 = arith.mulf %99, %100 : vector<8x8xf32>
    %cst_33 = arith.constant dense<0xFF800000> : vector<8xf32>
    %102 = vector.multi_reduction <maximumf>, %101, %cst_33 [1] : vector<8x8xf32> to vector<8xf32>
    %103 = vector.shape_cast %102 : vector<8xf32> to vector<8x1xf32>
    %104 = vector.broadcast %103 : vector<8x1xf32> to vector<8x8xf32>
    %105 = arith.subf %101, %104 : vector<8x8xf32>
    %106 = math.exp %105 : vector<8x8xf32>
    %cst_34 = arith.constant dense<0.000000e+00> : vector<8xf32>
    %107 = vector.multi_reduction <add>, %106, %cst_34 [1] : vector<8x8xf32> to vector<8xf32>
    %108 = vector.shape_cast %107 : vector<8xf32> to vector<8x1xf32>
    %109 = tpu.reciprocal %108 {approx = true} : vector<8x1xf32> -> vector<8x1xf32>
    %110 = vector.broadcast %109 : vector<8x1xf32> to vector<8x8xf32>
    %111 = arith.mulf %106, %110 : vector<8x8xf32>
    %112 = vector.extract_strided_slice %33 {offsets = [0, 0, 24], sizes = [8, 8, 8], strides = [1, 1, 1]} : vector<8x8x32xf32> to vector<8x8x8xf32>
    %113 = tpu.transpose %111, [1, 0] : vector<8x8xf32> -> vector<8x8xf32>
    %114 = vector.shape_cast %113 : vector<8x8xf32> to vector<8x8x1xf32>
    %115 = vector.broadcast %114 : vector<8x8x1xf32> to vector<8x8x8xf32>
    %116 = arith.mulf %115, %112 : vector<8x8x8xf32>
    %cst_35 = arith.constant dense<0.000000e+00> : vector<8x8xf32>
    %117 = vector.multi_reduction <add>, %116, %cst_35 [0] : vector<8x8x8xf32> to vector<8x8xf32>
    %118 = tpu.concatenate %54, %75, %96, %117 in 1 : vector<8x8xf32>, vector<8x8xf32>, vector<8x8xf32>, vector<8x8xf32> -> vector<8x32xf32>
    %c0_36 = arith.constant 0 : index
    %c0_37 = arith.constant 0 : index
    %119 = vector.load %arg6[%c0_36, %c0_37] : memref<32x32xf32, #tpu.memory_space<vmem>>, vector<32x32xf32>
    %cst_38 = arith.constant dense<0.000000e+00> : vector<8x32xf32>
    %120 = tpu.matmul %118, %119, %cst_38 {dimension_numbers = #tpu.dot_dimension_numbers<[1], [0], [0], [1], [0, 0, 1, 1], [], []>} : vector<8x32xf32>, vector<32x32xf32>, vector<8x32xf32> -> vector<8x32xf32>
    %c0_39 = arith.constant 0 : index
    %c0_40 = arith.constant 0 : index
    %c0_41 = arith.constant 0 : index
    %121 = vector.load %arg7[%c0_39, %c0_40, %c0_41] : memref<1x8x32xf32, #tpu.memory_space<vmem>>, vector<1x8x32xf32>
    %122 = vector.shape_cast %121 : vector<1x8x32xf32> to vector<8x32xf32>
    %123 = vector.shape_cast %120 : vector<8x32xf32> to vector<1x8x32xf32>
    tpu.vector_store %arg7[%c0_39, %c0_40, %c0_41], %123 {strides = array<i32>} : memref<1x8x32xf32, #tpu.memory_space<vmem>>, vector<1x8x32xf32>,
    return
  }
  func.func @transform_0(%arg0: i32) -> (i32, i32, i32) {
    %c0_i32 = arith.constant 0 : i32
    %c0_i32_0 = arith.constant 0 : i32
    %c0_i32_1 = arith.constant 0 : i32
    return %arg0, %c0_i32, %c0_i32_0 : i32, i32, i32
  }
  func.func @transform_1(%arg0: i32) -> (i32, i32) {
    %c0_i32 = arith.constant 0 : i32
    %c0_i32_0 = arith.constant 0 : i32
    %c0_i32_1 = arith.constant 0 : i32
    return %c0_i32, %c0_i32_0 : i32, i32
  }
  func.func @transform_2(%arg0: i32) -> (i32, i32) {
    %c0_i32 = arith.constant 0 : i32
    %c0_i32_0 = arith.constant 0 : i32
    %c0_i32_1 = arith.constant 0 : i32
    return %c0_i32, %c0_i32_0 : i32, i32
  }
  func.func @transform_3(%arg0: i32) -> (i32, i32) {
    %c0_i32 = arith.constant 0 : i32
    %c0_i32_0 = arith.constant 0 : i32
    %c0_i32_1 = arith.constant 0 : i32
    return %c0_i32, %c0_i32_0 : i32, i32
  }
  func.func @transform_4(%arg0: i32) -> (i32, i32) {
    %c0_i32 = arith.constant 0 : i32
    %c0_i32_0 = arith.constant 0 : i32
    %c0_i32_1 = arith.constant 0 : i32
    return %c0_i32, %c0_i32_0 : i32, i32
  }
  func.func @transform_5(%arg0: i32) -> (i32, i32) {
    %c0_i32 = arith.constant 0 : i32
    %c0_i32_0 = arith.constant 0 : i32
    %c0_i32_1 = arith.constant 0 : i32
    return %c0_i32, %c0_i32_0 : i32, i32
  }
  func.func @transform_6(%arg0: i32) -> (i32, i32, i32) {
    %c0_i32 = arith.constant 0 : i32
    %c0_i32_0 = arith.constant 0 : i32
    %c0_i32_1 = arith.constant 0 : i32
    return %arg0, %c0_i32, %c0_i32_0 : i32, i32, i32
  }
}

</mosaic_0001>

<llo_original>
// kernel: tpu_custom_call.1
$region0: #{tpu_custom_call.1}
  #allocation0 [shape = 'u32[]', space=smem, size = 0x4, offset = 0x4, fixed_abs, tag = 'smem constant byte address 0x4 - core index']
  #allocation1 [shape = 'u32[144,128]{1,0:T(1,128)}', space=vmem, size = 0x12000, scoped, tag = 'internal scratch']
  %s0 = inlined_call_operand.hbm [shape: f32[2,8,32], index: 0, kind: input, shape index: {}]
  %s1 = inlined_call_operand.hbm [shape: f32[32,128], index: 1, kind: input, shape index: {}]
  %s2 = inlined_call_operand.vmem [shape: f32[1,64], index: 2, kind: input, shape index: {}]
  %s3 = inlined_call_operand.vmem [shape: f32[1,64], index: 3, kind: input, shape index: {}]
  %s4 = inlined_call_operand.hbm [shape: f32[64,256], index: 4, kind: input, shape index: {}]
  %s5 = inlined_call_operand.hbm [shape: f32[32,32], index: 5, kind: input, shape index: {}]
  %s6 = inlined_call_operand.hbm [shape: f32[2,8,32], index: 6, kind: output, shape index: {}]
  %s7 = sld [smem:[#allocation0]]
  $region73: #{tpu_custom_call.1} parent=0
    _
  %s9 = ssub.s32 1, %s7
  %s10 = scalar_select 0, %s9, %s7
  $region1: #{tpu_custom_call.1} parent=0
    #allocation2 [shape = 'u8[8192]{0}', space=vmem, size = 0x2000, scoped, tag = 'input window, operand 0']
    #allocation3 [shape = 's32[2]{0}', space=sflag, size = 0x8, scoped, tag = 'scoped memory for tpu_custom_call.1']
    #allocation4 [shape = 's32[2]{0}', space=sflag, size = 0x8, scoped, tag = 'scoped memory for tpu_custom_call.1']
    #allocation5 [shape = 'u8[16384]{0}', space=vmem, size = 0x4000, scoped, tag = 'input window, operand 1, single buffered']
    #allocation6 [shape = 's32[1]{0}', space=sflag, size = 0x4, scoped, tag = 'scoped memory for tpu_custom_call.1']
    #allocation7 [shape = 'u8[65536]{0}', space=vmem, size = 0x10000, scoped, tag = 'input window, operand 4, single buffered']
    #allocation8 [shape = 'u8[16384]{0}', space=vmem, size = 0x4000, scoped, tag = 'input window, operand 5, single buffered']
    #allocation9 [shape = 's32[1]{0}', space=sflag, size = 0x4, scoped, tag = 'scoped memory for tpu_custom_call.1']
    #allocation10 [shape = 'u8[8192]{0}', space=vmem, size = 0x2000, scoped, tag = 'output window, operand 0']
    %11 = vsyncpa [#allocation3], 0
    %s12 = scalar_lea.sflag [#allocation3], 1
    %13 = vsyncpa %s12, 0
    %14 = vsyncpa [#allocation6], 0
    %15 = vsyncpa [#allocation9], 0
    %16 = vsyncpa [#allocation4], 0
    %s17 = scalar_lea.sflag [#allocation4], 1
    %18 = vsyncpa %s17, 0
    loop: start=0, step=1, limit=4
    $region2: #{tpu_custom_call.1} parent=1 // loop_pre_header
      _
    $region3: #{tpu_custom_call.1} parent=1 // loop_header
      %s20 = sphi 0, %s24
      %p21 = scmp.ge.s32.totalorder %s20, 4
      %s30 = sphi 0, %s32
      %s33 = sphi 0, %s30
      %s34 = sphi 0, %s33
      %s50 = sphi 0, %s34
      %s54 = sphi 0, %s54
      %s56 = sphi 0, %s54
      %s57 = sphi 0, %s56
      %s71 = sphi 0, %s57
      %s75 = sphi 0, %s75
      %s77 = sphi 0, %s75
      %s78 = sphi 0, %s77
      %s92 = sphi 0, %s78
      %s96 = sphi 0, %s96
      %s98 = sphi 0, %s96
      %s99 = sphi 0, %s98
      %s113 = sphi 0, %s99
      %s117 = sphi 0, %s117
      %s119 = sphi 0, %s117
      %s120 = sphi 0, %s119
      %s134 = sphi 0, %s120
      %s138 = sphi 0, %s138
      %s140 = sphi 0, %s138
      %s141 = sphi 0, %s140
      %s155 = sphi 0, %s141
      %s161 = sphi 0, %s163
      %s164 = sphi 0, %s161
      %s165 = sphi 0, %s164
      %s181 = sphi 0, %s165
    $region4: #{tpu_custom_call.1} parent=1 // loop_header_branch
      %23 = sbr.rel (%p21) target = $region8
    $region5: #{tpu_custom_call.1} parent=1 // loop_body
      %s25 = ssub.s32 %s20, 1
      %s26 = ssub.s32 %s20, 2
      %s27 = sadd.s32 %s20, 1
      %s28 = ssub.s32 %s20, %s27
      %p29 = scmp.eq.s32.totalorder %s28, 0
      %s31 = sadd.s32 %s30, 1
      %s32 = scalar_select %p29, %s30, %s31
      %p35 = pneg %p29
      %p36 = scmp.eq.s32.totalorder %s20, 1
      %p37 = por %p35, %p36
      %p38 = scmp.ne.s32.totalorder %s30, %s33
      %p39 = scmp.eq.s32.totalorder %s20, 0
      %p40 = por %p38, %p39
      %p41 = scmp.ne.s32.totalorder %s30, %s33
      %p42 = scmp.eq.s32.totalorder %s25, 1
      %p43 = por %p41, %p42
      %p44 = scmp.ne.s32.totalorder %s33, %s34
      %p45 = scmp.eq.s32.totalorder %s25, 0
      %p46 = por %p44, %p45
      %p47 = scmp.ne.s32.totalorder %s33, %s34
      %p48 = scmp.eq.s32.totalorder %s26, 1
      %p49 = por %p47, %p48
      %p51 = scmp.ne.s32.totalorder %s34, %s50
      %p52 = scmp.eq.s32.totalorder %s26, 0
      %p53 = por %p51, %p52
      %s55 = sadd.s32 %s54, 1
      %p58 = scmp.eq.s32.totalorder %s20, 1
      %p59 = scmp.ne.s32.totalorder %s54, %s56
      %p60 = scmp.eq.s32.totalorder %s20, 0
      %p61 = por %p59, %p60
      %p62 = scmp.ne.s32.totalorder %s54, %s56
      %p63 = scmp.eq.s32.totalorder %s25, 1
      %p64 = por %p62, %p63
      %p65 = scmp.ne.s32.totalorder %s56, %s57
      %p66 = scmp.eq.s32.totalorder %s25, 0
      %p67 = por %p65, %p66
      %p68 = scmp.ne.s32.totalorder %s56, %s57
      %p69 = scmp.eq.s32.totalorder %s26, 1
      %p70 = por %p68, %p69
      %p72 = scmp.ne.s32.totalorder %s57, %s71
      %p73 = scmp.eq.s32.totalorder %s26, 0
      %p74 = por %p72, %p73
      %s76 = sadd.s32 %s75, 1
      %p79 = scmp.eq.s32.totalorder %s20, 1
      %p80 = scmp.ne.s32.totalorder %s75, %s77
      %p81 = scmp.eq.s32.totalorder %s20, 0
      %p82 = por %p80, %p81
      %p83 = scmp.ne.s32.totalorder %s75, %s77
      %p84 = scmp.eq.s32.totalorder %s25, 1
      %p85 = por %p83, %p84
      %p86 = scmp.ne.s32.totalorder %s77, %s78
      %p87 = scmp.eq.s32.totalorder %s25, 0
      %p88 = por %p86, %p87
      %p89 = scmp.ne.s32.totalorder %s77, %s78
      %p90 = scmp.eq.s32.totalorder %s26, 1
      %p91 = por %p89, %p90
      %p93 = scmp.ne.s32.totalorder %s78, %s92
      %p94 = scmp.eq.s32.totalorder %s26, 0
      %p95 = por %p93, %p94
      %s97 = sadd.s32 %s96, 1
      %p100 = scmp.eq.s32.totalorder %s20, 1
      %p101 = scmp.ne.s32.totalorder %s96, %s98
      %p102 = scmp.eq.s32.totalorder %s20, 0
      %p103 = por %p101, %p102
      %p104 = scmp.ne.s32.totalorder %s96, %s98
      %p105 = scmp.eq.s32.totalorder %s25, 1
      %p106 = por %p104, %p105
      %p107 = scmp.ne.s32.totalorder %s98, %s99
      %p108 = scmp.eq.s32.totalorder %s25, 0
      %p109 = por %p107, %p108
      %p110 = scmp.ne.s32.totalorder %s98, %s99
      %p111 = scmp.eq.s32.totalorder %s26, 1
      %p112 = por %p110, %p111
      %p114 = scmp.ne.s32.totalorder %s99, %s113
      %p115 = scmp.eq.s32.totalorder %s26, 0
      %p116 = por %p114, %p115
      %s118 = sadd.s32 %s117, 1
      %p121 = scmp.eq.s32.totalorder %s20, 1
      %p122 = scmp.ne.s32.totalorder %s117, %s119
      %p123 = scmp.eq.s32.totalorder %s20, 0
      %p124 = por %p122, %p123
      %p125 = scmp.ne.s32.totalorder %s117, %s119
      %p126 = scmp.eq.s32.totalorder %s25, 1
      %p127 = por %p125, %p126
      %p128 = scmp.ne.s32.totalorder %s119, %s120
      %p129 = scmp.eq.s32.totalorder %s25, 0
      %p130 = por %p128, %p129
      %p131 = scmp.ne.s32.totalorder %s119, %s120
      %p132 = scmp.eq.s32.totalorder %s26, 1
      %p133 = por %p131, %p132
      %p135 = scmp.ne.s32.totalorder %s120, %s134
      %p136 = scmp.eq.s32.totalorder %s26, 0
      %p137 = por %p135, %p136
      %s139 = sadd.s32 %s138, 1
      %p142 = scmp.eq.s32.totalorder %s20, 1
      %p143 = scmp.ne.s32.totalorder %s138, %s140
      %p144 = scmp.eq.s32.totalorder %s20, 0
      %p145 = por %p143, %p144
      %p146 = scmp.ne.s32.totalorder %s138, %s140
      %p147 = scmp.eq.s32.totalorder %s25, 1
      %p148 = por %p146, %p147
      %p149 = scmp.ne.s32.totalorder %s140, %s141
      %p150 = scmp.eq.s32.totalorder %s25, 0
      %p151 = por %p149, %p150
      %p152 = scmp.ne.s32.totalorder %s140, %s141
      %p153 = scmp.eq.s32.totalorder %s26, 1
      %p154 = por %p152, %p153
      %p156 = scmp.ne.s32.totalorder %s141, %s155
      %p157 = scmp.eq.s32.totalorder %s26, 0
      %p158 = por %p156, %p157
      %s159 = ssub.s32 %s20, %s27
      %p160 = scmp.eq.s32.totalorder %s159, 0
      %s162 = sadd.s32 %s161, 1
      %s163 = scalar_select %p160, %s161, %s162
      %p166 = pneg %p160
      %p167 = scmp.eq.s32.totalorder %s20, 1
      %p168 = por %p166, %p167
      %p169 = scmp.ne.s32.totalorder %s161, %s164
      %p170 = scmp.eq.s32.totalorder %s20, 0
      %p171 = por %p169, %p170
      %p172 = scmp.ne.s32.totalorder %s161, %s164
      %p173 = scmp.eq.s32.totalorder %s25, 1
      %p174 = por %p172, %p173
      %p175 = scmp.ne.s32.totalorder %s164, %s165
      %p176 = scmp.eq.s32.totalorder %s25, 0
      %p177 = por %p175, %p176
      %p178 = scmp.ne.s32.totalorder %s164, %s165
      %p179 = scmp.eq.s32.totalorder %s26, 1
      %p180 = por %p178, %p179
      %p182 = scmp.ne.s32.totalorder %s165, %s181
      %p183 = scmp.eq.s32.totalorder %s26, 0
      %p184 = por %p182, %p183
      %p185 = scmp.le.s32.totalorder 1, %s20
      %p186 = scmp.lt.s32.totalorder %s20, 3
      %p187 = pnand %p185, %p186
      %p188 = pneg %p187
      // Predicated region
      $region9: #{tpu_custom_call.1} parent=5 // pred_check
        _
      $region10: #{tpu_custom_call.1} parent=5 // pred_check_branch
        %190 = sbr.rel (%p187) target = $region12
      $region11: #{tpu_custom_call.1} parent=5 // pred_region
        %s191 = ssub.s32 %s20, 1
        // Predicated region
        $region13: #{tpu_custom_call.1} parent=11 // pred_check
          %p192 = pneg %p67
        $region14: #{tpu_custom_call.1} parent=11 // pred_check_branch
          %194 = sbr.rel (%p192) target = $region16
        $region15: #{tpu_custom_call.1} parent=11 // pred_region
          %s196 = ssub.s32 512, 512
          %197 = vsyncadd [#allocation6], %s196
          %s198 = sshll.u32 [#allocation5], 4
          %s199 = int_to_ptr.vmem [resolvable:$true] %s198
          %204 = dma.hbm_to_vmem [thread:$0]  %s1, 512, %s199, [#allocation6], 128, 128, 8
        $region16: #{tpu_custom_call.1} parent=11 // pred_fallthru
          _
        // Predicated region
        $region17: #{tpu_custom_call.1} parent=11 // pred_check
          %p205 = pneg %p88
        $region18: #{tpu_custom_call.1} parent=11 // pred_check_branch
          %207 = sbr.rel (%p205) target = $region20
        $region19: #{tpu_custom_call.1} parent=11 // pred_region
          _
        $region20: #{tpu_custom_call.1} parent=11 // pred_fallthru
          _
        // Predicated region
        $region21: #{tpu_custom_call.1} parent=11 // pred_check
          %p208 = pneg %p109
        $region22: #{tpu_custom_call.1} parent=11 // pred_check_branch
          %210 = sbr.rel (%p208) target = $region24
        $region23: #{tpu_custom_call.1} parent=11 // pred_region
          _
        $region24: #{tpu_custom_call.1} parent=11 // pred_fallthru
          _
        // Predicated region
        $region25: #{tpu_custom_call.1} parent=11 // pred_check
          %p211 = pneg %p130
        $region26: #{tpu_custom_call.1} parent=11 // pred_check_branch
          %213 = sbr.rel (%p211) target = $region28
        $region27: #{tpu_custom_call.1} parent=11 // pred_region
          %s215 = ssub.s32 2048, 2048
          %216 = vsyncadd [#allocation6], %s215
          %s217 = sshll.u32 [#allocation7], 4
          %s218 = int_to_ptr.vmem [resolvable:$true] %s217
          %223 = dma.hbm_to_vmem [thread:$0]  %s4, 2048, %s218, [#allocation6], 256, 256, 16
        $region28: #{tpu_custom_call.1} parent=11 // pred_fallthru
          _
        // Predicated region
        $region29: #{tpu_custom_call.1} parent=11 // pred_check
          %p224 = pneg %p151
        $region30: #{tpu_custom_call.1} parent=11 // pred_check_branch
          %226 = sbr.rel (%p224) target = $region32
        $region31: #{tpu_custom_call.1} parent=11 // pred_region
          %s228 = ssub.s32 512, 512
          %229 = vsyncadd [#allocation9], %s228
          %s230 = sshll.u32 [#allocation8], 4
          %s231 = int_to_ptr.vmem [resolvable:$true] %s230
          %236 = dma.hbm_to_vmem [thread:$0]  %s5, 512, %s231, [#allocation9], 128, 128, 8
        $region32: #{tpu_custom_call.1} parent=11 // pred_fallthru
          _
      $region12: #{tpu_custom_call.1} parent=5 // pred_fallthru
        _
      %p237 = scmp.lt.s32.totalorder %s20, 2
      // Predicated region
      $region33: #{tpu_custom_call.1} parent=5 // pred_check
        %p238 = pneg %p237
      $region34: #{tpu_custom_call.1} parent=5 // pred_check_branch
        %240 = sbr.rel (%p238) target = $region36
      $region35: #{tpu_custom_call.1} parent=5 // pred_region
        // Predicated region
        $region37: #{tpu_custom_call.1} parent=35 // pred_check
          %p241 = pneg %p40
        $region38: #{tpu_custom_call.1} parent=35 // pred_check_branch
          %243 = sbr.rel (%p241) target = $region40
        $region39: #{tpu_custom_call.1} parent=35 // pred_region
          %s244 = sand.u32 %s30, 1
          %s245 = scalar_lea.sflag [#allocation3], %s244
          %s246 = sand.u32 %s30, 1
          %s247 = smul.addr %s246, 8
          %s248 = scalar_lea.vmem [#allocation2], %s247
          %s250 = ssub.s32 128, 128
          %251 = vsyncadd %s245, %s250
          %s252 = smul.addr %s20, 128
          %s253 = scalar_lea.hbm %s0, %s252
          %s255 = sshll.u32 %s248, 4
          %s256 = int_to_ptr.vmem [resolvable:$true] %s255
          %258 = dma.hbm_to_vmem [thread:$0]  %s253, 128, %s256, %s245
        $region40: #{tpu_custom_call.1} parent=35 // pred_fallthru
          _
      $region36: #{tpu_custom_call.1} parent=5 // pred_fallthru
        _
      %p259 = scmp.le.s32.totalorder 1, %s20
      %p260 = scmp.lt.s32.totalorder %s20, 3
      %p261 = pnand %p259, %p260
      %p262 = pneg %p261
      // Predicated region
      $region41: #{tpu_custom_call.1} parent=5 // pred_check
        _
      $region42: #{tpu_custom_call.1} parent=5 // pred_check_branch
        %264 = sbr.rel (%p261) target = $region44
      $region43: #{tpu_custom_call.1} parent=5 // pred_region
        %s265 = ssub.s32 %s20, 1
        %s266 = sand.u32 %s33, 1
        %s267 = scalar_lea.sflag [#allocation3], %s266
        %s268 = sand.u32 %s33, 1
        %s269 = smul.addr %s268, 8
        %s270 = scalar_lea.vmem [#allocation2], %s269
        // Predicated region
        $region45: #{tpu_custom_call.1} parent=43 // pred_check
          %p271 = pneg %p46
        $region46: #{tpu_custom_call.1} parent=43 // pred_check_branch
          %273 = sbr.rel (%p271) target = $region48
        $region47: #{tpu_custom_call.1} parent=43 // pred_region
          %274 = dma.done %s267, 128
        $region48: #{tpu_custom_call.1} parent=43 // pred_fallthru
          _
        // Predicated region
        $region49: #{tpu_custom_call.1} parent=43 // pred_check
          %p275 = pneg %p67
        $region50: #{tpu_custom_call.1} parent=43 // pred_check_branch
          %277 = sbr.rel (%p275) target = $region52
        $region51: #{tpu_custom_call.1} parent=43 // pred_region
          %278 = dma.done [#allocation6], 512
        $region52: #{tpu_custom_call.1} parent=43 // pred_fallthru
          _
        // Predicated region
        $region53: #{tpu_custom_call.1} parent=43 // pred_check
          %p279 = pneg %p130
        $region54: #{tpu_custom_call.1} parent=43 // pred_check_branch
          %281 = sbr.rel (%p279) target = $region56
        $region55: #{tpu_custom_call.1} parent=43 // pred_region
          %282 = dma.done [#allocation6], 2048
        $region56: #{tpu_custom_call.1} parent=43 // pred_fallthru
          _
        // Predicated region
        $region57: #{tpu_custom_call.1} parent=43 // pred_check
          %p283 = pneg %p151
        $region58: #{tpu_custom_call.1} parent=43 // pred_check_branch
          %285 = sbr.rel (%p283) target = $region60
        $region59: #{tpu_custom_call.1} parent=43 // pred_region
          %286 = dma.done [#allocation9], 512
        $region60: #{tpu_custom_call.1} parent=43 // pred_fallthru
          _
        %s287 = sand.u32 %s33, 1
        %s288 = scalar_lea.sflag [#allocation3], %s287
        %s289 = sand.u32 %s33, 1
        %s290 = smul.addr %s289, 8
        %s291 = scalar_lea.vmem [#allocation2], %s290
        %p292 = pneg %p46
        %p293 = pneg %p43
        %p294 = pneg %p67
        %p295 = pneg %p64
        %p296 = pneg %p88
        %p297 = pneg %p85
        %p298 = pneg %p109
        %p299 = pneg %p106
        %p300 = pneg %p130
        %p301 = pneg %p127
        %p302 = pneg %p151
        %p303 = pneg %p148
        %p304 = pneg %p177
        %p305 = pneg %p174
        %s306 = sand.u32 %s164, 1
        %s307 = scalar_lea.sflag [#allocation4], %s306
        %s308 = sand.u32 %s164, 1
        %s309 = smul.addr %s308, 8
        %s310 = scalar_lea.vmem [#allocation10], %s309
        %v311 = vld [vmem:[%s270] sm:$0xff]
        %v312 = vld [vmem:[#allocation5] sm:$0xff]
        %v313 = vld [vmem:[#allocation5 + $0x8] sm:$0xff]
        %v314 = vld [vmem:[#allocation5 + $0x10] sm:$0xff]
        %v315 = vld [vmem:[#allocation5 + $0x18] sm:$0xff]
        %vm316 = vcmask 261120
        %v318 = vsel %vm316, %v311, 0
        %320 = vmatprep.subr.mxu0 0.0
        %321 = vmatpush1.msra.mxu0 %v312
        %322 = vmatprep.subr.mxu0 0.0
        %323 = vmatpush1.msra.mxu0 %v313
        %324 = vmatprep.subr.mxu0 0.0
        %325 = vmatpush1.msra.mxu0 %v314
        %326 = vmatprep.subr.mxu0 0.0
        %327 = vmatpush1.msra.mxu0 %v315
        %328 = vmatprep.subr.mxu0 0.0
        %329 = vmatpush1.msra.mxu0 0.0
        %330 = vmatprep.subr.mxu0 0.0
        %331 = vmatpush1.msra.mxu0 0.0
        %332 = vmatprep.subr.mxu0 0.0
        %333 = vmatpush1.msra.mxu0 0.0
        %334 = vmatprep.subr.mxu0 0.0
        %335 = vmatpush1.msra.mxu0 0.0
        %336 = vmatprep.subr.mxu0 0.0
        %337 = vmatpush1.msra.mxu0 0.0
        %338 = vmatprep.subr.mxu0 0.0
        %339 = vmatpush1.msra.mxu0 0.0
        %340 = vmatprep.subr.mxu0 0.0
        %341 = vmatpush1.msra.mxu0 0.0
        %342 = vmatprep.subr.mxu0 0.0
        %343 = vmatpush1.msra.mxu0 0.0
        %344 = vmatprep.subr.mxu0 0.0
        %345 = vmatpush1.msra.mxu0 0.0
        %346 = vmatprep.subr.mxu0 0.0
        %347 = vmatpush1.msra.mxu0 0.0
        %348 = vmatprep.subr.mxu0 0.0
        %349 = vmatpush1.msra.mxu0 0.0
        %350 = vmatprep.subr.mxu0 0.0
        %351 = vmatpush1.msra.mxu0 0.0
        %352 = vmatprep.subr.mxu0 0.0
        %353 = vmatpush1.msra.mxu0 0.0
        %354 = vmatprep.subr.mxu0 0.0
        %355 = vmatpush1.msra.mxu0 0.0
        %356 = vmatprep.subr.mxu0 0.0
        %357 = vmatpush1.msra.mxu0 0.0
        %358 = vmatprep.subr.mxu0 0.0
        %359 = vmatpush1.msra.mxu0 0.0
        %360 = vmatprep.subr.mxu0 0.0
        %361 = vmatpush1.msra.mxu0 0.0
        %362 = vmatprep.subr.mxu0 0.0
        %363 = vmatpush1.msra.mxu0 0.0
        %364 = vmatprep.subr.mxu0 0.0
        %365 = vmatpush1.msra.mxu0 0.0
        %366 = vmatprep.subr.mxu0 0.0
        %367 = vmatpush1.msra.mxu0 0.0
        %368 = vmatprep.subr.mxu0 0.0
        %369 = vmatpush1.msra.mxu0 0.0
        %370 = vmatprep.subr.mxu0 0.0
        %371 = vmatpush1.msra.mxu0 0.0
        %372 = vmatprep.subr.mxu0 0.0
        %373 = vmatpush1.msra.mxu0 0.0
        %374 = vmatprep.subr.mxu0 0.0
        %375 = vmatpush1.msra.mxu0 0.0
        %376 = vmatprep.subr.mxu0 0.0
        %377 = vmatpush1.msra.mxu0 0.0
        %378 = vmatprep.subr.mxu0 0.0
        %379 = vmatpush1.msra.mxu0 0.0
        %380 = vmatprep.subr.mxu0 0.0
        %381 = vmatpush1.msra.mxu0 0.0
        %382 = vmatprep.subr.mxu0 0.0
        %383 = vmatpush1.msra.mxu0 0.0
        %384 = vmatprep.mubr.f32.mxu0 0.0
        %385 = vmatmul.mubr.f32.gmra.mrb[0].mxu0 %v318
        %v386 = vpop.f32.mrb[0].mxu0
        %v387 = vadd.f32 0.0, %v386
        %v388 = vpop.f32.mrb[0].mxu0
        %389 = vdwg.mxu0
        %391 = vrot.lane.b32.xlu0 %v387, 64
        %v392 = vpop.permute.xlu0 %391
        %vm394 = vcmask 523264
        %v395 = vsel %vm394, %v392, 0.0
        %396 = vadd.xlane.f32.xlu0 %v395
        %v397 = vpop.xlane.xlu0 %396
        %v398 = vrcp.pop 64.0
        %v399 = vmul.f32 %v397, %v398
        %v400 = vsub.f32 %v387, %v399
        %v401 = vmul.f32 %v400, %v400
        %403 = vrot.lane.b32.xlu0 %v401, 64
        %v404 = vpop.permute.xlu0 %403
        %v406 = vsel %vm394, %v404, 0.0
        %407 = vadd.xlane.f32.xlu0 %v406
        %v408 = vpop.xlane.xlu0 %407
        %v409 = vmul.f32 %v408, %v398
        %v410 = vadd.f32 %v409, 1e-05
        %v411 = vrsqrt.pop %v410
        %v412 = vmul.f32 %v400, %v411
        %v413 = vld [vmem:[%s2] sm:$0x1]
        %v415 = vlaneseq
        %v416 = vshrl.u32 %v415, 7
        %v417 = vsub.s32 0, %v416
        %v418 = vrot.slane %v413, %v417
        %419 = vrot.lane.b32.xlu0 %v418, 64
        %v420 = vpop.permute.xlu0 %419
        %v422 = vmul.f32 %v412, %v420
        %v423 = vld [vmem:[%s3] sm:$0x1]
        %v425 = vlaneseq
        %v426 = vshrl.u32 %v425, 7
        %v427 = vsub.s32 0, %v426
        %v428 = vrot.slane %v423, %v427
        %429 = vrot.lane.b32.xlu0 %v428, 64
        %v430 = vpop.permute.xlu0 %429
        %v432 = vadd.f32 %v422, %v430
        %v433 = vld [vmem:[#allocation7] sm:$0xff]
        %v434 = vld [vmem:[#allocation7 + $0x8] sm:$0xff]
        %v435 = vld [vmem:[#allocation7 + $0x10] sm:$0xff]
        %v436 = vld [vmem:[#allocation7 + $0x18] sm:$0xff]
        %v437 = vld [vmem:[#allocation7 + $0x20] sm:$0xff]
        %v438 = vld [vmem:[#allocation7 + $0x28] sm:$0xff]
        %v439 = vld [vmem:[#allocation7 + $0x30] sm:$0xff]
        %v440 = vld [vmem:[#allocation7 + $0x38] sm:$0xff]
        %v441 = vld [vmem:[#allocation7 + $0x40] sm:$0xff]
        %v442 = vld [vmem:[#allocation7 + $0x48] sm:$0xff]
        %v443 = vld [vmem:[#allocation7 + $0x50] sm:$0xff]
        %v444 = vld [vmem:[#allocation7 + $0x58] sm:$0xff]
        %v445 = vld [vmem:[#allocation7 + $0x60] sm:$0xff]
        %v446 = vld [vmem:[#allocation7 + $0x68] sm:$0xff]
        %v447 = vld [vmem:[#allocation7 + $0x70] sm:$0xff]
        %v448 = vld [vmem:[#allocation7 + $0x78] sm:$0xff]
        %450 = vrot.lane.b32.xlu0 %v432, 64
        %v451 = vpop.permute.xlu0 %450
        %v452 = vsel %vm394, %v451, 0
        %454 = vmatprep.subr.mxu0 %v434
        %455 = vmatpush1.msra.mxu0 %v433
        %456 = vmatprep.subr.mxu0 %v436
        %457 = vmatpush1.msra.mxu0 %v435
        %458 = vmatprep.subr.mxu0 %v438
        %459 = vmatpush1.msra.mxu0 %v437
        %460 = vmatprep.subr.mxu0 %v440
        %461 = vmatpush1.msra.mxu0 %v439
        %462 = vmatprep.subr.mxu0 %v442
        %463 = vmatpush1.msra.mxu0 %v441
        %464 = vmatprep.subr.mxu0 %v444
        %465 = vmatpush1.msra.mxu0 %v443
        %466 = vmatprep.subr.mxu0 %v446
        %467 = vmatpush1.msra.mxu0 %v445
        %468 = vmatprep.subr.mxu0 %v448
        %469 = vmatpush1.msra.mxu0 %v447
        %470 = vmatprep.subr.mxu0 0.0
        %471 = vmatpush1.msra.mxu0 0.0
        %472 = vmatprep.subr.mxu0 0.0
        %473 = vmatpush1.msra.mxu0 0.0
        %474 = vmatprep.subr.mxu0 0.0
        %475 = vmatpush1.msra.mxu0 0.0
        %476 = vmatprep.subr.mxu0 0.0
        %477 = vmatpush1.msra.mxu0 0.0
        %478 = vmatprep.subr.mxu0 0.0
        %479 = vmatpush1.msra.mxu0 0.0
        %480 = vmatprep.subr.mxu0 0.0
        %481 = vmatpush1.msra.mxu0 0.0
        %482 = vmatprep.subr.mxu0 0.0
        %483 = vmatpush1.msra.mxu0 0.0
        %484 = vmatprep.subr.mxu0 0.0
        %485 = vmatpush1.msra.mxu0 0.0
        %486 = vmatprep.subr.mxu0 0.0
        %487 = vmatpush1.msra.mxu0 0.0
        %488 = vmatprep.subr.mxu0 0.0
        %489 = vmatpush1.msra.mxu0 0.0
        %490 = vmatprep.subr.mxu0 0.0
        %491 = vmatpush1.msra.mxu0 0.0
        %492 = vmatprep.subr.mxu0 0.0
        %493 = vmatpush1.msra.mxu0 0.0
        %494 = vmatprep.subr.mxu0 0.0
        %495 = vmatpush1.msra.mxu0 0.0
        %496 = vmatprep.subr.mxu0 0.0
        %497 = vmatpush1.msra.mxu0 0.0
        %498 = vmatprep.subr.mxu0 0.0
        %499 = vmatpush1.msra.mxu0 0.0
        %500 = vmatprep.subr.mxu0 0.0
        %501 = vmatpush1.msra.mxu0 0.0
        %502 = vmatprep.subr.mxu0 0.0
        %503 = vmatpush1.msra.mxu0 0.0
        %504 = vmatprep.subr.mxu0 0.0
        %505 = vmatpush1.msra.mxu0 0.0
        %506 = vmatprep.subr.mxu0 0.0
        %507 = vmatpush1.msra.mxu0 0.0
        %508 = vmatprep.subr.mxu0 0.0
        %509 = vmatpush1.msra.mxu0 0.0
        %510 = vmatprep.subr.mxu0 0.0
        %511 = vmatpush1.msra.mxu0 0.0
        %512 = vmatprep.subr.mxu0 0.0
        %513 = vmatpush1.msra.mxu0 0.0
        %514 = vmatprep.subr.mxu0 0.0
        %515 = vmatpush1.msra.mxu0 0.0
        %516 = vmatprep.subr.mxu0 0.0
        %517 = vmatpush1.msra.mxu0 0.0
        %518 = vmatprep.mubr.f32.mxu0 0.0
        %519 = vmatmul.mubr.f32.gmra.mrb[0].mxu0 %v452
        %v520 = vpop.f32.mrb[0].mxu0
        %v521 = vadd.f32 0.0, %v520
        %v522 = vpop.f32.mrb[0].mxu0
        %v523 = vadd.f32 0.0, %v522
        %524 = vdwg.mxu0
        %526 = vrot.lane.b32.xlu0 %v521, 96
        %v527 = vpop.permute.xlu0 %526
        %529 = vrot.lane.b32.xlu0 %v521, 64
        %v530 = vpop.permute.xlu0 %529
        %532 = vrot.lane.b32.xlu0 %v521, 32
        %v533 = vpop.permute.xlu0 %532
        %536 = vrot.lane.b32.xlu0 %v523, 96
        %v537 = vpop.permute.xlu0 %536
        %539 = vrot.lane.b32.xlu0 %v523, 64
        %v540 = vpop.permute.xlu0 %539
        %542 = vrot.lane.b32.xlu0 %v523, 32
        %v543 = vpop.permute.xlu0 %542
        %v545 = vcombine.low %v521, %v530
        %v546 = vcombine.high %v521, %v530
        %v548 = vunpack.c.l.s4 1983009808
        %v549 = vunpack.c.0.s8 %v548
        %v550 = vlaneseq
        %v551 = vshrl.u32 %v550, 7
        %v552 = vsub.s32 %v549, %v551
        %v553 = vrot.slane %v545, %v552
        %v555 = vunpack.c.l.s4 1983009808
        %v556 = vunpack.c.0.s8 %v555
        %v557 = vlaneseq
        %v558 = vshrl.u32 %v557, 7
        %v559 = vsub.s32 %v556, %v558
        %v560 = vrot.slane %v546, %v559
        %v561 = vcombine.low %v527, %v533
        %v562 = vcombine.high %v527, %v533
        %v564 = vunpack.c.l.s4 1983009808
        %v565 = vunpack.c.0.s8 %v564
        %v566 = vlaneseq
        %v567 = vshrl.u32 %v566, 7
        %v568 = vsub.s32 %v565, %v567
        %v569 = vrot.slane %v561, %v568
        %v571 = vunpack.c.l.s4 1983009808
        %v572 = vunpack.c.0.s8 %v571
        %v573 = vlaneseq
        %v574 = vshrl.u32 %v573, 7
        %v575 = vsub.s32 %v572, %v574
        %v576 = vrot.slane %v562, %v575
        %v577 = vcombine.low %v523, %v540
        %v578 = vcombine.high %v523, %v540
        %v580 = vunpack.c.l.s4 1983009808
        %v581 = vunpack.c.0.s8 %v580
        %v582 = vlaneseq
        %v583 = vshrl.u32 %v582, 7
        %v584 = vsub.s32 %v581, %v583
        %v585 = vrot.slane %v577, %v584
        %v587 = vunpack.c.l.s4 1983009808
        %v588 = vunpack.c.0.s8 %v587
        %v589 = vlaneseq
        %v590 = vshrl.u32 %v589, 7
        %v591 = vsub.s32 %v588, %v590
        %v592 = vrot.slane %v578, %v591
        %v593 = vcombine.low %v537, %v543
        %v594 = vcombine.high %v537, %v543
        %v596 = vunpack.c.l.s4 1983009808
        %v597 = vunpack.c.0.s8 %v596
        %v598 = vlaneseq
        %v599 = vshrl.u32 %v598, 7
        %v600 = vsub.s32 %v597, %v599
        %v601 = vrot.slane %v593, %v600
        %v603 = vunpack.c.l.s4 1983009808
        %v604 = vunpack.c.0.s8 %v603
        %v605 = vlaneseq
        %v606 = vshrl.u32 %v605, 7
        %v607 = vsub.s32 %v604, %v606
        %v608 = vrot.slane %v594, %v607
        %v609 = vcombine.low %v553, %v569
        %v610 = vcombine.high %v553, %v569
        %v612 = vunpack.c.l.s4 1934713408
        %v613 = vunpack.c.0.s8 %v612
        %v614 = vlaneseq
        %v615 = vshrl.u32 %v614, 7
        %v616 = vsub.s32 %v613, %v615
        %v617 = vrot.slane %v609, %v616
        %v619 = vunpack.c.l.s4 1934713408
        %v620 = vunpack.c.0.s8 %v619
        %v621 = vlaneseq
        %v622 = vshrl.u32 %v621, 7
        %v623 = vsub.s32 %v620, %v622
        %v624 = vrot.slane %v610, %v623
        %v625 = vcombine.low %v560, %v576
        %v626 = vcombine.high %v560, %v576
        %v628 = vunpack.c.l.s4 1934713408
        %v629 = vunpack.c.0.s8 %v628
        %v630 = vlaneseq
        %v631 = vshrl.u32 %v630, 7
        %v632 = vsub.s32 %v629, %v631
        %v633 = vrot.slane %v625, %v632
        %v635 = vunpack.c.l.s4 1934713408
        %v636 = vunpack.c.0.s8 %v635
        %v637 = vlaneseq
        %v638 = vshrl.u32 %v637, 7
        %v639 = vsub.s32 %v636, %v638
        %v640 = vrot.slane %v626, %v639
        %v641 = vcombine.low %v585, %v601
        %v642 = vcombine.high %v585, %v601
        %v644 = vunpack.c.l.s4 1934713408
        %v645 = vunpack.c.0.s8 %v644
        %v646 = vlaneseq
        %v647 = vshrl.u32 %v646, 7
        %v648 = vsub.s32 %v645, %v647
        %v649 = vrot.slane %v641, %v648
        %v651 = vunpack.c.l.s4 1934713408
        %v652 = vunpack.c.0.s8 %v651
        %v653 = vlaneseq
        %v654 = vshrl.u32 %v653, 7
        %v655 = vsub.s32 %v652, %v654
        %v656 = vrot.slane %v642, %v655
        %v657 = vcombine.low %v592, %v608
        %v658 = vcombine.high %v592, %v608
        %v660 = vunpack.c.l.s4 1934713408
        %v661 = vunpack.c.0.s8 %v660
        %v662 = vlaneseq
        %v663 = vshrl.u32 %v662, 7
        %v664 = vsub.s32 %v661, %v663
        %v665 = vrot.slane %v657, %v664
        %v667 = vunpack.c.l.s4 1934713408
        %v668 = vunpack.c.0.s8 %v667
        %v669 = vlaneseq
        %v670 = vshrl.u32 %v669, 7
        %v671 = vsub.s32 %v668, %v670
        %v672 = vrot.slane %v658, %v671
        %v673 = vcombine.low %v617, %v649
        %v674 = vcombine.high %v617, %v649
        %v675 = vcombine.low %v624, %v656
        %v676 = vcombine.high %v624, %v656
        %v677 = vcombine.low %v633, %v665
        %v678 = vcombine.high %v633, %v665
        %v679 = vcombine.low %v640, %v672
        %v680 = vcombine.high %v640, %v672
        %681 = vrot.lane.b32.xlu0 %v387, 96
        %v682 = vpop.permute.xlu0 %681
        %vm683 = vcmask 64512
        %v684 = vsel %vm683, %v387, 0
        %v686 = vsel %vm683, %v682, 0
        %688 = vmatprep.subr.mxu0 0.0
        %689 = vmatpush1.xpose.msra.mxu0 %v686
        %690 = vmatprep.subr.mxu0 0.0
        %691 = vmatpush1.xpose.msra.mxu0 0.0
        %692 = vmatprep.subr.mxu0 0.0
        %693 = vmatpush1.xpose.msra.mxu0 0.0
        %694 = vmatprep.subr.mxu0 0.0
        %695 = vmatpush1.xpose.msra.mxu0 0.0
        %696 = vmatprep.subr.mxu0 0.0
        %697 = vmatpush1.xpose.msra.mxu0 0.0
        %698 = vmatprep.subr.mxu0 0.0
        %699 = vmatpush1.xpose.msra.mxu0 0.0
        %700 = vmatprep.subr.mxu0 0.0
        %701 = vmatpush1.xpose.msra.mxu0 0.0
        %702 = vmatprep.subr.mxu0 0.0
        %703 = vmatpush1.xpose.msra.mxu0 0.0
        %704 = vmatprep.subr.mxu0 0.0
        %705 = vmatpush1.xpose.msra.mxu0 0.0
        %706 = vmatprep.subr.mxu0 0.0
        %707 = vmatpush1.xpose.msra.mxu0 0.0
        %708 = vmatprep.subr.mxu0 0.0
        %709 = vmatpush1.xpose.msra.mxu0 0.0
        %710 = vmatprep.subr.mxu0 0.0
        %711 = vmatpush1.xpose.msra.mxu0 0.0
        %712 = vmatprep.subr.mxu0 0.0
        %713 = vmatpush1.xpose.msra.mxu0 0.0
        %714 = vmatprep.subr.mxu0 0.0
        %715 = vmatpush1.xpose.msra.mxu0 0.0
        %716 = vmatprep.subr.mxu0 0.0
        %717 = vmatpush1.xpose.msra.mxu0 0.0
        %718 = vmatprep.subr.mxu0 0.0
        %719 = vmatpush1.xpose.msra.mxu0 0.0
        %720 = vmatprep.subr.mxu0 0.0
        %721 = vmatpush1.xpose.msra.mxu0 0.0
        %722 = vmatprep.subr.mxu0 0.0
        %723 = vmatpush1.xpose.msra.mxu0 0.0
        %724 = vmatprep.subr.mxu0 0.0
        %725 = vmatpush1.xpose.msra.mxu0 0.0
        %726 = vmatprep.subr.mxu0 0.0
        %727 = vmatpush1.xpose.msra.mxu0 0.0
        %728 = vmatprep.subr.mxu0 0.0
        %729 = vmatpush1.xpose.msra.mxu0 0.0
        %730 = vmatprep.subr.mxu0 0.0
        %731 = vmatpush1.xpose.msra.mxu0 0.0
        %732 = vmatprep.subr.mxu0 0.0
        %733 = vmatpush1.xpose.msra.mxu0 0.0
        %734 = vmatprep.subr.mxu0 0.0
        %735 = vmatpush1.xpose.msra.mxu0 0.0
        %736 = vmatprep.subr.mxu0 0.0
        %737 = vmatpush1.xpose.msra.mxu0 0.0
        %738 = vmatprep.subr.mxu0 0.0
        %739 = vmatpush1.xpose.msra.mxu0 0.0
        %740 = vmatprep.subr.mxu0 0.0
        %741 = vmatpush1.xpose.msra.mxu0 0.0
        %742 = vmatprep.subr.mxu0 0.0
        %743 = vmatpush1.xpose.msra.mxu0 0.0
        %744 = vmatprep.subr.mxu0 0.0
        %745 = vmatpush1.xpose.msra.mxu0 0.0
        %746 = vmatprep.subr.mxu0 0.0
        %747 = vmatpush1.xpose.msra.mxu0 0.0
        %748 = vmatprep.subr.mxu0 0.0
        %749 = vmatpush1.xpose.msra.mxu0 0.0
        %750 = vmatprep.subr.mxu0 0.0
        %751 = vmatpush1.xpose.msra.mxu0 0.0
        %752 = vmatprep.mubr.f32.mxu0 0.0
        %753 = vmatmul.mubr.f32.gmra.mrb[0].mxu0 %v684
        %v754 = vpop.f32.mrb[0].mxu0
        %v755 = vadd.f32 0.0, %v754
        %v756 = vpop.f32.mrb[0].mxu0
        %757 = vdwg.mxu0
        %v758 = vmul.f32 %v755, 0.35355338
        %v759 = vsel %vm683, %v758, -inf
        %760 = vmax.xlane.f32.xlu0 %v759
        %v761 = vpop.xlane.xlu0 %760
        %v762 = vsub.f32 %v758, %v761
        %v763 = vmul.f32 %v762, 1.442695
        %v764 = vpow.pop %v763
        %v765 = vsel %vm683, %v764, 0.0
        %766 = vadd.xlane.f32.xlu0 %v765
        %v767 = vpop.xlane.xlu0 %766
        %v768 = vrcp.pop %v767
        %v769 = vmul.f32 %v764, %v768
        %770 = vxpose.xlu0.b32.start [1/16] %v769, 128
        %771 = vxpose.xlu0.b32.cont [2/16] 0.0, 128
        %772 = vxpose.xlu0.b32.cont [3/16] 0.0, 128
        %773 = vxpose.xlu0.b32.cont [4/16] 0.0, 128
        %774 = vxpose.xlu0.b32.cont [5/16] 0.0, 128
        %775 = vxpose.xlu0.b32.cont [6/16] 0.0, 128
        %776 = vxpose.xlu0.b32.cont [7/16] 0.0, 128
        %777 = vxpose.xlu0.b32.cont [8/16] 0.0, 128
        %778 = vxpose.xlu0.b32.cont [9/16] 0.0, 128
        %779 = vxpose.xlu0.b32.cont [10/16] 0.0, 128
        %780 = vxpose.xlu0.b32.cont [11/16] 0.0, 128
        %781 = vxpose.xlu0.b32.cont [12/16] 0.0, 128
        %782 = vxpose.xlu0.b32.cont [13/16] 0.0, 128
        %783 = vxpose.xlu0.b32.cont [14/16] 0.0, 128
        %784 = vxpose.xlu0.b32.cont [15/16] 0.0, 128
        %785 = vxpose.xlu0.b32.end [16/16] 0.0, 128
        %v786 = vpop.trf.xlu0
        %v787 = vpop.trf.xlu0
        %v788 = vpop.trf.xlu0
        %v789 = vpop.trf.xlu0
        %v790 = vpop.trf.xlu0
        %v791 = vpop.trf.xlu0
        %v792 = vpop.trf.xlu0
        %v793 = vpop.trf.xlu0
        %v794 = vpop.trf.xlu0
        %v795 = vpop.trf.xlu0
        %v796 = vpop.trf.xlu0
        %v797 = vpop.trf.xlu0
        %v798 = vpop.trf.xlu0
        %v799 = vpop.trf.xlu0
        %v800 = vpop.trf.xlu0
        %v801 = vpop.trf.xlu0
        %v802 = vlaneseq
        %v803 = vshrl.u32 %v802, 7
        %v804 = vsub.s32 0, %v803
        %v805 = vrot.slane %v786, %v804
        %807 = vbcast.lane.b32.xlu0 %v805, 256
        %v808 = vpop.permute.xlu0 %807
        %v809 = vlaneseq
        %v810 = vshrl.u32 %v809, 7
        %v811 = vsub.s32 1, %v810
        %v812 = vrot.slane %v786, %v811
        %814 = vbcast.lane.b32.xlu0 %v812, 256
        %v815 = vpop.permute.xlu0 %814
        %v816 = vlaneseq
        %v817 = vshrl.u32 %v816, 7
        %v818 = vsub.s32 2, %v817
        %v819 = vrot.slane %v786, %v818
        %821 = vbcast.lane.b32.xlu0 %v819, 256
        %v822 = vpop.permute.xlu0 %821
        %v823 = vlaneseq
        %v824 = vshrl.u32 %v823, 7
        %v825 = vsub.s32 3, %v824
        %v826 = vrot.slane %v786, %v825
        %828 = vbcast.lane.b32.xlu0 %v826, 256
        %v829 = vpop.permute.xlu0 %828
        %v830 = vlaneseq
        %v831 = vshrl.u32 %v830, 7
        %v832 = vsub.s32 4, %v831
        %v833 = vrot.slane %v786, %v832
        %835 = vbcast.lane.b32.xlu0 %v833, 256
        %v836 = vpop.permute.xlu0 %835
        %v837 = vlaneseq
        %v838 = vshrl.u32 %v837, 7
        %v839 = vsub.s32 5, %v838
        %v840 = vrot.slane %v786, %v839
        %842 = vbcast.lane.b32.xlu0 %v840, 256
        %v843 = vpop.permute.xlu0 %842
        %v844 = vlaneseq
        %v845 = vshrl.u32 %v844, 7
        %v846 = vsub.s32 6, %v845
        %v847 = vrot.slane %v786, %v846
        %849 = vbcast.lane.b32.xlu0 %v847, 256
        %v850 = vpop.permute.xlu0 %849
        %v851 = vlaneseq
        %v852 = vshrl.u32 %v851, 7
        %v853 = vsub.s32 7, %v852
        %v854 = vrot.slane %v786, %v853
        %856 = vbcast.lane.b32.xlu0 %v854, 256
        %v857 = vpop.permute.xlu0 %856
        %v858 = vmul.f32 %v808, %v673
        %v859 = vmul.f32 %v815, %v674
        %v860 = vmul.f32 %v822, %v675
        %v861 = vmul.f32 %v829, %v676
        %v862 = vmul.f32 %v836, %v677
        %v863 = vmul.f32 %v843, %v678
        %v864 = vmul.f32 %v850, %v679
        %v865 = vmul.f32 %v857, %v680
        %v866 = vsel %vm683, %v858, 0.0
        %v867 = vsel %vm683, %v859, 0.0
        %v868 = vadd.f32 %v866, %v867
        %v869 = vsel %vm683, %v860, 0.0
        %v870 = vadd.f32 %v868, %v869
        %v871 = vsel %vm683, %v861, 0.0
        %v872 = vadd.f32 %v870, %v871
        %v873 = vsel %vm683, %v862, 0.0
        %v874 = vadd.f32 %v872, %v873
        %v875 = vsel %vm683, %v863, 0.0
        %v876 = vadd.f32 %v874, %v875
        %v877 = vsel %vm683, %v864, 0.0
        %v878 = vadd.f32 %v876, %v877
        %v879 = vsel %vm683, %v865, 0.0
        %v880 = vadd.f32 %v878, %v879
        %881 = vrot.lane.b32.xlu0 %v387, 120
        %v882 = vpop.permute.xlu0 %881
        %883 = vrot.lane.b32.xlu0 %v387, 88
        %v884 = vpop.permute.xlu0 %883
        %v885 = vsel %vm683, %v882, 0
        %v887 = vsel %vm683, %v884, 0
        %889 = vmatprep.subr.mxu0 0.0
        %890 = vmatpush1.xpose.msra.mxu0 %v887
        %891 = vmatprep.subr.mxu0 0.0
        %892 = vmatpush1.xpose.msra.mxu0 0.0
        %893 = vmatprep.subr.mxu0 0.0
        %894 = vmatpush1.xpose.msra.mxu0 0.0
        %895 = vmatprep.subr.mxu0 0.0
        %896 = vmatpush1.xpose.msra.mxu0 0.0
        %897 = vmatprep.subr.mxu0 0.0
        %898 = vmatpush1.xpose.msra.mxu0 0.0
        %899 = vmatprep.subr.mxu0 0.0
        %900 = vmatpush1.xpose.msra.mxu0 0.0
        %901 = vmatprep.subr.mxu0 0.0
        %902 = vmatpush1.xpose.msra.mxu0 0.0
        %903 = vmatprep.subr.mxu0 0.0
        %904 = vmatpush1.xpose.msra.mxu0 0.0
        %905 = vmatprep.subr.mxu0 0.0
        %906 = vmatpush1.xpose.msra.mxu0 0.0
        %907 = vmatprep.subr.mxu0 0.0
        %908 = vmatpush1.xpose.msra.mxu0 0.0
        %909 = vmatprep.subr.mxu0 0.0
        %910 = vmatpush1.xpose.msra.mxu0 0.0
        %911 = vmatprep.subr.mxu0 0.0
        %912 = vmatpush1.xpose.msra.mxu0 0.0
        %913 = vmatprep.subr.mxu0 0.0
        %914 = vmatpush1.xpose.msra.mxu0 0.0
        %915 = vmatprep.subr.mxu0 0.0
        %916 = vmatpush1.xpose.msra.mxu0 0.0
        %917 = vmatprep.subr.mxu0 0.0
        %918 = vmatpush1.xpose.msra.mxu0 0.0
        %919 = vmatprep.subr.mxu0 0.0
        %920 = vmatpush1.xpose.msra.mxu0 0.0
        %921 = vmatprep.subr.mxu0 0.0
        %922 = vmatpush1.xpose.msra.mxu0 0.0
        %923 = vmatprep.subr.mxu0 0.0
        %924 = vmatpush1.xpose.msra.mxu0 0.0
        %925 = vmatprep.subr.mxu0 0.0
        %926 = vmatpush1.xpose.msra.mxu0 0.0
        %927 = vmatprep.subr.mxu0 0.0
        %928 = vmatpush1.xpose.msra.mxu0 0.0
        %929 = vmatprep.subr.mxu0 0.0
        %930 = vmatpush1.xpose.msra.mxu0 0.0
        %931 = vmatprep.subr.mxu0 0.0
        %932 = vmatpush1.xpose.msra.mxu0 0.0
        %933 = vmatprep.subr.mxu0 0.0
        %934 = vmatpush1.xpose.msra.mxu0 0.0
        %935 = vmatprep.subr.mxu0 0.0
        %936 = vmatpush1.xpose.msra.mxu0 0.0
        %937 = vmatprep.subr.mxu0 0.0
        %938 = vmatpush1.xpose.msra.mxu0 0.0
        %939 = vmatprep.subr.mxu0 0.0
        %940 = vmatpush1.xpose.msra.mxu0 0.0
        %941 = vmatprep.subr.mxu0 0.0
        %942 = vmatpush1.xpose.msra.mxu0 0.0
        %943 = vmatprep.subr.mxu0 0.0
        %944 = vmatpush1.xpose.msra.mxu0 0.0
        %945 = vmatprep.subr.mxu0 0.0
        %946 = vmatpush1.xpose.msra.mxu0 0.0
        %947 = vmatprep.subr.mxu0 0.0
        %948 = vmatpush1.xpose.msra.mxu0 0.0
        %949 = vmatprep.subr.mxu0 0.0
        %950 = vmatpush1.xpose.msra.mxu0 0.0
        %951 = vmatprep.subr.mxu0 0.0
        %952 = vmatpush1.xpose.msra.mxu0 0.0
        %953 = vmatprep.mubr.f32.mxu0 0.0
        %954 = vmatmul.mubr.f32.gmra.mrb[0].mxu0 %v885
        %v955 = vpop.f32.mrb[0].mxu0
        %v956 = vadd.f32 0.0, %v955
        %v957 = vpop.f32.mrb[0].mxu0
        %958 = vdwg.mxu0
        %v959 = vmul.f32 %v956, 0.35355338
        %v960 = vsel %vm683, %v959, -inf
        %961 = vmax.xlane.f32.xlu0 %v960
        %v962 = vpop.xlane.xlu0 %961
        %v963 = vsub.f32 %v959, %v962
        %v964 = vmul.f32 %v963, 1.442695
        %v965 = vpow.pop %v964
        %v966 = vsel %vm683, %v965, 0.0
        %967 = vadd.xlane.f32.xlu0 %v966
        %v968 = vpop.xlane.xlu0 %967
        %v969 = vrcp.pop %v968
        %v970 = vmul.f32 %v965, %v969
        %971 = vxpose.xlu0.b32.start [1/16] %v970, 128
        %972 = vxpose.xlu0.b32.cont [2/16] 0.0, 128
        %973 = vxpose.xlu0.b32.cont [3/16] 0.0, 128
        %974 = vxpose.xlu0.b32.cont [4/16] 0.0, 128
        %975 = vxpose.xlu0.b32.cont [5/16] 0.0, 128
        %976 = vxpose.xlu0.b32.cont [6/16] 0.0, 128
        %977 = vxpose.xlu0.b32.cont [7/16] 0.0, 128
        %978 = vxpose.xlu0.b32.cont [8/16] 0.0, 128
        %979 = vxpose.xlu0.b32.cont [9/16] 0.0, 128
        %980 = vxpose.xlu0.b32.cont [10/16] 0.0, 128
        %981 = vxpose.xlu0.b32.cont [11/16] 0.0, 128
        %982 = vxpose.xlu0.b32.cont [12/16] 0.0, 128
        %983 = vxpose.xlu0.b32.cont [13/16] 0.0, 128
        %984 = vxpose.xlu0.b32.cont [14/16] 0.0, 128
        %985 = vxpose.xlu0.b32.cont [15/16] 0.0, 128
        %986 = vxpose.xlu0.b32.end [16/16] 0.0, 128
        %v987 = vpop.trf.xlu0
        %v988 = vpop.trf.xlu0
        %v989 = vpop.trf.xlu0
        %v990 = vpop.trf.xlu0
        %v991 = vpop.trf.xlu0
        %v992 = vpop.trf.xlu0
        %v993 = vpop.trf.xlu0
        %v994 = vpop.trf.xlu0
        %v995 = vpop.trf.xlu0
        %v996 = vpop.trf.xlu0
        %v997 = vpop.trf.xlu0
        %v998 = vpop.trf.xlu0
        %v999 = vpop.trf.xlu0
        %v1000 = vpop.trf.xlu0
        %v1001 = vpop.trf.xlu0
        %v1002 = vpop.trf.xlu0
        %v1003 = vlaneseq
        %v1004 = vshrl.u32 %v1003, 7
        %v1005 = vsub.s32 0, %v1004
        %v1006 = vrot.slane %v987, %v1005
        %1008 = vbcast.lane.b32.xlu0 %v1006, 256
        %v1009 = vpop.permute.xlu0 %1008
        %v1010 = vlaneseq
        %v1011 = vshrl.u32 %v1010, 7
        %v1012 = vsub.s32 1, %v1011
        %v1013 = vrot.slane %v987, %v1012
        %1015 = vbcast.lane.b32.xlu0 %v1013, 256
        %v1016 = vpop.permute.xlu0 %1015
        %v1017 = vlaneseq
        %v1018 = vshrl.u32 %v1017, 7
        %v1019 = vsub.s32 2, %v1018
        %v1020 = vrot.slane %v987, %v1019
        %1022 = vbcast.lane.b32.xlu0 %v1020, 256
        %v1023 = vpop.permute.xlu0 %1022
        %v1024 = vlaneseq
        %v1025 = vshrl.u32 %v1024, 7
        %v1026 = vsub.s32 3, %v1025
        %v1027 = vrot.slane %v987, %v1026
        %1029 = vbcast.lane.b32.xlu0 %v1027, 256
        %v1030 = vpop.permute.xlu0 %1029
        %v1031 = vlaneseq
        %v1032 = vshrl.u32 %v1031, 7
        %v1033 = vsub.s32 4, %v1032
        %v1034 = vrot.slane %v987, %v1033
        %1036 = vbcast.lane.b32.xlu0 %v1034, 256
        %v1037 = vpop.permute.xlu0 %1036
        %v1038 = vlaneseq
        %v1039 = vshrl.u32 %v1038, 7
        %v1040 = vsub.s32 5, %v1039
        %v1041 = vrot.slane %v987, %v1040
        %1043 = vbcast.lane.b32.xlu0 %v1041, 256
        %v1044 = vpop.permute.xlu0 %1043
        %v1045 = vlaneseq
        %v1046 = vshrl.u32 %v1045, 7
        %v1047 = vsub.s32 6, %v1046
        %v1048 = vrot.slane %v987, %v1047
        %1050 = vbcast.lane.b32.xlu0 %v1048, 256
        %v1051 = vpop.permute.xlu0 %1050
        %v1052 = vlaneseq
        %v1053 = vshrl.u32 %v1052, 7
        %v1054 = vsub.s32 7, %v1053
        %v1055 = vrot.slane %v987, %v1054
        %1057 = vbcast.lane.b32.xlu0 %v1055, 256
        %v1058 = vpop.permute.xlu0 %1057
        %v1059 = vmul.f32 %v1009, %v673
        %v1060 = vmul.f32 %v1016, %v674
        %v1061 = vmul.f32 %v1023, %v675
        %v1062 = vmul.f32 %v1030, %v676
        %v1063 = vmul.f32 %v1037, %v677
        %v1064 = vmul.f32 %v1044, %v678
        %v1065 = vmul.f32 %v1051, %v679
        %v1066 = vmul.f32 %v1058, %v680
        %vm1067 = vcmask 130112
        %v1068 = vsel %vm1067, %v1059, 0.0
        %v1069 = vsel %vm1067, %v1060, 0.0
        %v1070 = vadd.f32 %v1068, %v1069
        %v1071 = vsel %vm1067, %v1061, 0.0
        %v1072 = vadd.f32 %v1070, %v1071
        %v1073 = vsel %vm1067, %v1062, 0.0
        %v1074 = vadd.f32 %v1072, %v1073
        %v1075 = vsel %vm1067, %v1063, 0.0
        %v1076 = vadd.f32 %v1074, %v1075
        %v1077 = vsel %vm1067, %v1064, 0.0
        %v1078 = vadd.f32 %v1076, %v1077
        %v1079 = vsel %vm1067, %v1065, 0.0
        %v1080 = vadd.f32 %v1078, %v1079
        %v1081 = vsel %vm1067, %v1066, 0.0
        %v1082 = vadd.f32 %v1080, %v1081
        %1083 = vrot.lane.b32.xlu0 %v387, 112
        %v1084 = vpop.permute.xlu0 %1083
        %1085 = vrot.lane.b32.xlu0 %v387, 80
        %v1086 = vpop.permute.xlu0 %1085
        %v1087 = vsel %vm683, %v1084, 0
        %v1089 = vsel %vm683, %v1086, 0
        %1091 = vmatprep.subr.mxu0 0.0
        %1092 = vmatpush1.xpose.msra.mxu0 %v1089
        %1093 = vmatprep.subr.mxu0 0.0
        %1094 = vmatpush1.xpose.msra.mxu0 0.0
        %1095 = vmatprep.subr.mxu0 0.0
        %1096 = vmatpush1.xpose.msra.mxu0 0.0
        %1097 = vmatprep.subr.mxu0 0.0
        %1098 = vmatpush1.xpose.msra.mxu0 0.0
        %1099 = vmatprep.subr.mxu0 0.0
        %1100 = vmatpush1.xpose.msra.mxu0 0.0
        %1101 = vmatprep.subr.mxu0 0.0
        %1102 = vmatpush1.xpose.msra.mxu0 0.0
        %1103 = vmatprep.subr.mxu0 0.0
        %1104 = vmatpush1.xpose.msra.mxu0 0.0
        %1105 = vmatprep.subr.mxu0 0.0
        %1106 = vmatpush1.xpose.msra.mxu0 0.0
        %1107 = vmatprep.subr.mxu0 0.0
        %1108 = vmatpush1.xpose.msra.mxu0 0.0
        %1109 = vmatprep.subr.mxu0 0.0
        %1110 = vmatpush1.xpose.msra.mxu0 0.0
        %1111 = vmatprep.subr.mxu0 0.0
        %1112 = vmatpush1.xpose.msra.mxu0 0.0
        %1113 = vmatprep.subr.mxu0 0.0
        %1114 = vmatpush1.xpose.msra.mxu0 0.0
        %1115 = vmatprep.subr.mxu0 0.0
        %1116 = vmatpush1.xpose.msra.mxu0 0.0
        %1117 = vmatprep.subr.mxu0 0.0
        %1118 = vmatpush1.xpose.msra.mxu0 0.0
        %1119 = vmatprep.subr.mxu0 0.0
        %1120 = vmatpush1.xpose.msra.mxu0 0.0
        %1121 = vmatprep.subr.mxu0 0.0
        %1122 = vmatpush1.xpose.msra.mxu0 0.0
        %1123 = vmatprep.subr.mxu0 0.0
        %1124 = vmatpush1.xpose.msra.mxu0 0.0
        %1125 = vmatprep.subr.mxu0 0.0
        %1126 = vmatpush1.xpose.msra.mxu0 0.0
        %1127 = vmatprep.subr.mxu0 0.0
        %1128 = vmatpush1.xpose.msra.mxu0 0.0
        %1129 = vmatprep.subr.mxu0 0.0
        %1130 = vmatpush1.xpose.msra.mxu0 0.0
        %1131 = vmatprep.subr.mxu0 0.0
        %1132 = vmatpush1.xpose.msra.mxu0 0.0
        %1133 = vmatprep.subr.mxu0 0.0
        %1134 = vmatpush1.xpose.msra.mxu0 0.0
        %1135 = vmatprep.subr.mxu0 0.0
        %1136 = vmatpush1.xpose.msra.mxu0 0.0
        %1137 = vmatprep.subr.mxu0 0.0
        %1138 = vmatpush1.xpose.msra.mxu0 0.0
        %1139 = vmatprep.subr.mxu0 0.0
        %1140 = vmatpush1.xpose.msra.mxu0 0.0
        %1141 = vmatprep.subr.mxu0 0.0
        %1142 = vmatpush1.xpose.msra.mxu0 0.0
        %1143 = vmatprep.subr.mxu0 0.0
        %1144 = vmatpush1.xpose.msra.mxu0 0.0
        %1145 = vmatprep.subr.mxu0 0.0
        %1146 = vmatpush1.xpose.msra.mxu0 0.0
        %1147 = vmatprep.subr.mxu0 0.0
        %1148 = vmatpush1.xpose.msra.mxu0 0.0
        %1149 = vmatprep.subr.mxu0 0.0
        %1150 = vmatpush1.xpose.msra.mxu0 0.0
        %1151 = vmatprep.subr.mxu0 0.0
        %1152 = vmatpush1.xpose.msra.mxu0 0.0
        %1153 = vmatprep.subr.mxu0 0.0
        %1154 = vmatpush1.xpose.msra.mxu0 0.0
        %1155 = vmatprep.mubr.f32.mxu0 0.0
        %1156 = vmatmul.mubr.f32.gmra.mrb[0].mxu0 %v1087
        %v1157 = vpop.f32.mrb[0].mxu0
        %v1158 = vadd.f32 0.0, %v1157
        %v1159 = vpop.f32.mrb[0].mxu0
        %1160 = vdwg.mxu0
        %v1161 = vmul.f32 %v1158, 0.35355338
        %v1162 = vsel %vm683, %v1161, -inf
        %1163 = vmax.xlane.f32.xlu0 %v1162
        %v1164 = vpop.xlane.xlu0 %1163
        %v1165 = vsub.f32 %v1161, %v1164
        %v1166 = vmul.f32 %v1165, 1.442695
        %v1167 = vpow.pop %v1166
        %v1168 = vsel %vm683, %v1167, 0.0
        %1169 = vadd.xlane.f32.xlu0 %v1168
        %v1170 = vpop.xlane.xlu0 %1169
        %v1171 = vrcp.pop %v1170
        %v1172 = vmul.f32 %v1167, %v1171
        %1173 = vxpose.xlu0.b32.start [1/16] %v1172, 128
        %1174 = vxpose.xlu0.b32.cont [2/16] 0.0, 128
        %1175 = vxpose.xlu0.b32.cont [3/16] 0.0, 128
        %1176 = vxpose.xlu0.b32.cont [4/16] 0.0, 128
        %1177 = vxpose.xlu0.b32.cont [5/16] 0.0, 128
        %1178 = vxpose.xlu0.b32.cont [6/16] 0.0, 128
        %1179 = vxpose.xlu0.b32.cont [7/16] 0.0, 128
        %1180 = vxpose.xlu0.b32.cont [8/16] 0.0, 128
        %1181 = vxpose.xlu0.b32.cont [9/16] 0.0, 128
        %1182 = vxpose.xlu0.b32.cont [10/16] 0.0, 128
        %1183 = vxpose.xlu0.b32.cont [11/16] 0.0, 128
        %1184 = vxpose.xlu0.b32.cont [12/16] 0.0, 128
        %1185 = vxpose.xlu0.b32.cont [13/16] 0.0, 128
        %1186 = vxpose.xlu0.b32.cont [14/16] 0.0, 128
        %1187 = vxpose.xlu0.b32.cont [15/16] 0.0, 128
        %1188 = vxpose.xlu0.b32.end [16/16] 0.0, 128
        %v1189 = vpop.trf.xlu0
        %v1190 = vpop.trf.xlu0
        %v1191 = vpop.trf.xlu0
        %v1192 = vpop.trf.xlu0
        %v1193 = vpop.trf.xlu0
        %v1194 = vpop.trf.xlu0
        %v1195 = vpop.trf.xlu0
        %v1196 = vpop.trf.xlu0
        %v1197 = vpop.trf.xlu0
        %v1198 = vpop.trf.xlu0
        %v1199 = vpop.trf.xlu0
        %v1200 = vpop.trf.xlu0
        %v1201 = vpop.trf.xlu0
        %v1202 = vpop.trf.xlu0
        %v1203 = vpop.trf.xlu0
        %v1204 = vpop.trf.xlu0
        %v1205 = vlaneseq
        %v1206 = vshrl.u32 %v1205, 7
        %v1207 = vsub.s32 0, %v1206
        %v1208 = vrot.slane %v1189, %v1207
        %1210 = vbcast.lane.b32.xlu0 %v1208, 256
        %v1211 = vpop.permute.xlu0 %1210
        %v1212 = vlaneseq
        %v1213 = vshrl.u32 %v1212, 7
        %v1214 = vsub.s32 1, %v1213
        %v1215 = vrot.slane %v1189, %v1214
        %1217 = vbcast.lane.b32.xlu0 %v1215, 256
        %v1218 = vpop.permute.xlu0 %1217
        %v1219 = vlaneseq
        %v1220 = vshrl.u32 %v1219, 7
        %v1221 = vsub.s32 2, %v1220
        %v1222 = vrot.slane %v1189, %v1221
        %1224 = vbcast.lane.b32.xlu0 %v1222, 256
        %v1225 = vpop.permute.xlu0 %1224
        %v1226 = vlaneseq
        %v1227 = vshrl.u32 %v1226, 7
        %v1228 = vsub.s32 3, %v1227
        %v1229 = vrot.slane %v1189, %v1228
        %1231 = vbcast.lane.b32.xlu0 %v1229, 256
        %v1232 = vpop.permute.xlu0 %1231
        %v1233 = vlaneseq
        %v1234 = vshrl.u32 %v1233, 7
        %v1235 = vsub.s32 4, %v1234
        %v1236 = vrot.slane %v1189, %v1235
        %1238 = vbcast.lane.b32.xlu0 %v1236, 256
        %v1239 = vpop.permute.xlu0 %1238
        %v1240 = vlaneseq
        %v1241 = vshrl.u32 %v1240, 7
        %v1242 = vsub.s32 5, %v1241
        %v1243 = vrot.slane %v1189, %v1242
        %1245 = vbcast.lane.b32.xlu0 %v1243, 256
        %v1246 = vpop.permute.xlu0 %1245
        %v1247 = vlaneseq
        %v1248 = vshrl.u32 %v1247, 7
        %v1249 = vsub.s32 6, %v1248
        %v1250 = vrot.slane %v1189, %v1249
        %1252 = vbcast.lane.b32.xlu0 %v1250, 256
        %v1253 = vpop.permute.xlu0 %1252
        %v1254 = vlaneseq
        %v1255 = vshrl.u32 %v1254, 7
        %v1256 = vsub.s32 7, %v1255
        %v1257 = vrot.slane %v1189, %v1256
        %1259 = vbcast.lane.b32.xlu0 %v1257, 256
        %v1260 = vpop.permute.xlu0 %1259
        %v1261 = vmul.f32 %v1211, %v673
        %v1262 = vmul.f32 %v1218, %v674
        %v1263 = vmul.f32 %v1225, %v675
        %v1264 = vmul.f32 %v1232, %v676
        %v1265 = vmul.f32 %v1239, %v677
        %v1266 = vmul.f32 %v1246, %v678
        %v1267 = vmul.f32 %v1253, %v679
        %v1268 = vmul.f32 %v1260, %v680
        %vm1269 = vcmask 195712
        %v1270 = vsel %vm1269, %v1261, 0.0
        %v1271 = vsel %vm1269, %v1262, 0.0
        %v1272 = vadd.f32 %v1270, %v1271
        %v1273 = vsel %vm1269, %v1263, 0.0
        %v1274 = vadd.f32 %v1272, %v1273
        %v1275 = vsel %vm1269, %v1264, 0.0
        %v1276 = vadd.f32 %v1274, %v1275
        %v1277 = vsel %vm1269, %v1265, 0.0
        %v1278 = vadd.f32 %v1276, %v1277
        %v1279 = vsel %vm1269, %v1266, 0.0
        %v1280 = vadd.f32 %v1278, %v1279
        %v1281 = vsel %vm1269, %v1267, 0.0
        %v1282 = vadd.f32 %v1280, %v1281
        %v1283 = vsel %vm1269, %v1268, 0.0
        %v1284 = vadd.f32 %v1282, %v1283
        %1285 = vrot.lane.b32.xlu0 %v387, 104
        %v1286 = vpop.permute.xlu0 %1285
        %1287 = vrot.lane.b32.xlu0 %v387, 72
        %v1288 = vpop.permute.xlu0 %1287
        %v1289 = vsel %vm683, %v1286, 0
        %v1291 = vsel %vm683, %v1288, 0
        %1293 = vmatprep.subr.mxu0 0.0
        %1294 = vmatpush1.xpose.msra.mxu0 %v1291
        %1295 = vmatprep.subr.mxu0 0.0
        %1296 = vmatpush1.xpose.msra.mxu0 0.0
        %1297 = vmatprep.subr.mxu0 0.0
        %1298 = vmatpush1.xpose.msra.mxu0 0.0
        %1299 = vmatprep.subr.mxu0 0.0
        %1300 = vmatpush1.xpose.msra.mxu0 0.0
        %1301 = vmatprep.subr.mxu0 0.0
        %1302 = vmatpush1.xpose.msra.mxu0 0.0
        %1303 = vmatprep.subr.mxu0 0.0
        %1304 = vmatpush1.xpose.msra.mxu0 0.0
        %1305 = vmatprep.subr.mxu0 0.0
        %1306 = vmatpush1.xpose.msra.mxu0 0.0
        %1307 = vmatprep.subr.mxu0 0.0
        %1308 = vmatpush1.xpose.msra.mxu0 0.0
        %1309 = vmatprep.subr.mxu0 0.0
        %1310 = vmatpush1.xpose.msra.mxu0 0.0
        %1311 = vmatprep.subr.mxu0 0.0
        %1312 = vmatpush1.xpose.msra.mxu0 0.0
        %1313 = vmatprep.subr.mxu0 0.0
        %1314 = vmatpush1.xpose.msra.mxu0 0.0
        %1315 = vmatprep.subr.mxu0 0.0
        %1316 = vmatpush1.xpose.msra.mxu0 0.0
        %1317 = vmatprep.subr.mxu0 0.0
        %1318 = vmatpush1.xpose.msra.mxu0 0.0
        %1319 = vmatprep.subr.mxu0 0.0
        %1320 = vmatpush1.xpose.msra.mxu0 0.0
        %1321 = vmatprep.subr.mxu0 0.0
        %1322 = vmatpush1.xpose.msra.mxu0 0.0
        %1323 = vmatprep.subr.mxu0 0.0
        %1324 = vmatpush1.xpose.msra.mxu0 0.0
        %1325 = vmatprep.subr.mxu0 0.0
        %1326 = vmatpush1.xpose.msra.mxu0 0.0
        %1327 = vmatprep.subr.mxu0 0.0
        %1328 = vmatpush1.xpose.msra.mxu0 0.0
        %1329 = vmatprep.subr.mxu0 0.0
        %1330 = vmatpush1.xpose.msra.mxu0 0.0
        %1331 = vmatprep.subr.mxu0 0.0
        %1332 = vmatpush1.xpose.msra.mxu0 0.0
        %1333 = vmatprep.subr.mxu0 0.0
        %1334 = vmatpush1.xpose.msra.mxu0 0.0
        %1335 = vmatprep.subr.mxu0 0.0
        %1336 = vmatpush1.xpose.msra.mxu0 0.0
        %1337 = vmatprep.subr.mxu0 0.0
        %1338 = vmatpush1.xpose.msra.mxu0 0.0
        %1339 = vmatprep.subr.mxu0 0.0
        %1340 = vmatpush1.xpose.msra.mxu0 0.0
        %1341 = vmatprep.subr.mxu0 0.0
        %1342 = vmatpush1.xpose.msra.mxu0 0.0
        %1343 = vmatprep.subr.mxu0 0.0
        %1344 = vmatpush1.xpose.msra.mxu0 0.0
        %1345 = vmatprep.subr.mxu0 0.0
        %1346 = vmatpush1.xpose.msra.mxu0 0.0
        %1347 = vmatprep.subr.mxu0 0.0
        %1348 = vmatpush1.xpose.msra.mxu0 0.0
        %1349 = vmatprep.subr.mxu0 0.0
        %1350 = vmatpush1.xpose.msra.mxu0 0.0
        %1351 = vmatprep.subr.mxu0 0.0
        %1352 = vmatpush1.xpose.msra.mxu0 0.0
        %1353 = vmatprep.subr.mxu0 0.0
        %1354 = vmatpush1.xpose.msra.mxu0 0.0
        %1355 = vmatprep.subr.mxu0 0.0
        %1356 = vmatpush1.xpose.msra.mxu0 0.0
        %1357 = vmatprep.mubr.f32.mxu0 0.0
        %1358 = vmatmul.mubr.f32.gmra.mrb[0].mxu0 %v1289
        %v1359 = vpop.f32.mrb[0].mxu0
        %v1360 = vadd.f32 0.0, %v1359
        %v1361 = vpop.f32.mrb[0].mxu0
        %1362 = vdwg.mxu0
        %v1363 = vmul.f32 %v1360, 0.35355338
        %v1364 = vsel %vm683, %v1363, -inf
        %1365 = vmax.xlane.f32.xlu0 %v1364
        %v1366 = vpop.xlane.xlu0 %1365
        %v1367 = vsub.f32 %v1363, %v1366
        %v1368 = vmul.f32 %v1367, 1.442695
        %v1369 = vpow.pop %v1368
        %v1370 = vsel %vm683, %v1369, 0.0
        %1371 = vadd.xlane.f32.xlu0 %v1370
        %v1372 = vpop.xlane.xlu0 %1371
        %v1373 = vrcp.pop %v1372
        %v1374 = vmul.f32 %v1369, %v1373
        %1375 = vxpose.xlu0.b32.start [1/16] %v1374, 128
        %1376 = vxpose.xlu0.b32.cont [2/16] 0.0, 128
        %1377 = vxpose.xlu0.b32.cont [3/16] 0.0, 128
        %1378 = vxpose.xlu0.b32.cont [4/16] 0.0, 128
        %1379 = vxpose.xlu0.b32.cont [5/16] 0.0, 128
        %1380 = vxpose.xlu0.b32.cont [6/16] 0.0, 128
        %1381 = vxpose.xlu0.b32.cont [7/16] 0.0, 128
        %1382 = vxpose.xlu0.b32.cont [8/16] 0.0, 128
        %1383 = vxpose.xlu0.b32.cont [9/16] 0.0, 128
        %1384 = vxpose.xlu0.b32.cont [10/16] 0.0, 128
        %1385 = vxpose.xlu0.b32.cont [11/16] 0.0, 128
        %1386 = vxpose.xlu0.b32.cont [12/16] 0.0, 128
        %1387 = vxpose.xlu0.b32.cont [13/16] 0.0, 128
        %1388 = vxpose.xlu0.b32.cont [14/16] 0.0, 128
        %1389 = vxpose.xlu0.b32.cont [15/16] 0.0, 128
        %1390 = vxpose.xlu0.b32.end [16/16] 0.0, 128
        %v1391 = vpop.trf.xlu0
        %v1392 = vpop.trf.xlu0
        %v1393 = vpop.trf.xlu0
        %v1394 = vpop.trf.xlu0
        %v1395 = vpop.trf.xlu0
        %v1396 = vpop.trf.xlu0
        %v1397 = vpop.trf.xlu0
        %v1398 = vpop.trf.xlu0
        %v1399 = vpop.trf.xlu0
        %v1400 = vpop.trf.xlu0
        %v1401 = vpop.trf.xlu0
        %v1402 = vpop.trf.xlu0
        %v1403 = vpop.trf.xlu0
        %v1404 = vpop.trf.xlu0
        %v1405 = vpop.trf.xlu0
        %v1406 = vpop.trf.xlu0
        %v1407 = vlaneseq
        %v1408 = vshrl.u32 %v1407, 7
        %v1409 = vsub.s32 0, %v1408
        %v1410 = vrot.slane %v1391, %v1409
        %1412 = vbcast.lane.b32.xlu0 %v1410, 256
        %v1413 = vpop.permute.xlu0 %1412
        %v1414 = vlaneseq
        %v1415 = vshrl.u32 %v1414, 7
        %v1416 = vsub.s32 1, %v1415
        %v1417 = vrot.slane %v1391, %v1416
        %1419 = vbcast.lane.b32.xlu0 %v1417, 256
        %v1420 = vpop.permute.xlu0 %1419
        %v1421 = vlaneseq
        %v1422 = vshrl.u32 %v1421, 7
        %v1423 = vsub.s32 2, %v1422
        %v1424 = vrot.slane %v1391, %v1423
        %1426 = vbcast.lane.b32.xlu0 %v1424, 256
        %v1427 = vpop.permute.xlu0 %1426
        %v1428 = vlaneseq
        %v1429 = vshrl.u32 %v1428, 7
        %v1430 = vsub.s32 3, %v1429
        %v1431 = vrot.slane %v1391, %v1430
        %1433 = vbcast.lane.b32.xlu0 %v1431, 256
        %v1434 = vpop.permute.xlu0 %1433
        %v1435 = vlaneseq
        %v1436 = vshrl.u32 %v1435, 7
        %v1437 = vsub.s32 4, %v1436
        %v1438 = vrot.slane %v1391, %v1437
        %1440 = vbcast.lane.b32.xlu0 %v1438, 256
        %v1441 = vpop.permute.xlu0 %1440
        %v1442 = vlaneseq
        %v1443 = vshrl.u32 %v1442, 7
        %v1444 = vsub.s32 5, %v1443
        %v1445 = vrot.slane %v1391, %v1444
        %1447 = vbcast.lane.b32.xlu0 %v1445, 256
        %v1448 = vpop.permute.xlu0 %1447
        %v1449 = vlaneseq
        %v1450 = vshrl.u32 %v1449, 7
        %v1451 = vsub.s32 6, %v1450
        %v1452 = vrot.slane %v1391, %v1451
        %1454 = vbcast.lane.b32.xlu0 %v1452, 256
        %v1455 = vpop.permute.xlu0 %1454
        %v1456 = vlaneseq
        %v1457 = vshrl.u32 %v1456, 7
        %v1458 = vsub.s32 7, %v1457
        %v1459 = vrot.slane %v1391, %v1458
        %1461 = vbcast.lane.b32.xlu0 %v1459, 256
        %v1462 = vpop.permute.xlu0 %1461
        %v1463 = vmul.f32 %v1413, %v673
        %v1464 = vmul.f32 %v1420, %v674
        %v1465 = vmul.f32 %v1427, %v675
        %v1466 = vmul.f32 %v1434, %v676
        %v1467 = vmul.f32 %v1441, %v677
        %v1468 = vmul.f32 %v1448, %v678
        %v1469 = vmul.f32 %v1455, %v679
        %v1470 = vmul.f32 %v1462, %v680
        %vm1471 = vcmask 261312
        %v1472 = vsel %vm1471, %v1463, 0.0
        %v1473 = vsel %vm1471, %v1464, 0.0
        %v1474 = vadd.f32 %v1472, %v1473
        %v1475 = vsel %vm1471, %v1465, 0.0
        %v1476 = vadd.f32 %v1474, %v1475
        %v1477 = vsel %vm1471, %v1466, 0.0
        %v1478 = vadd.f32 %v1476, %v1477
        %v1479 = vsel %vm1471, %v1467, 0.0
        %v1480 = vadd.f32 %v1478, %v1479
        %v1481 = vsel %vm1471, %v1468, 0.0
        %v1482 = vadd.f32 %v1480, %v1481
        %v1483 = vsel %vm1471, %v1469, 0.0
        %v1484 = vadd.f32 %v1482, %v1483
        %v1485 = vsel %vm1471, %v1470, 0.0
        %v1486 = vadd.f32 %v1484, %v1485
        %v1487 = vsel %vm683, %v880, %v1082
        %vm1488 = vcmask 130048
        %v1489 = vsel %vm1488, %v1487, %v1284
        %vm1490 = vcmask 195584
        %v1491 = vsel %vm1490, %v1489, %v1486
        %v1492 = vld [vmem:[#allocation8] sm:$0xff]
        %v1493 = vld [vmem:[#allocation8 + $0x8] sm:$0xff]
        %v1494 = vld [vmem:[#allocation8 + $0x10] sm:$0xff]
        %v1495 = vld [vmem:[#allocation8 + $0x18] sm:$0xff]
        %v1497 = vsel %vm316, %v1491, 0
        %1499 = vmatprep.subr.mxu0 0.0
        %1500 = vmatpush1.msra.mxu0 %v1492
        %1501 = vmatprep.subr.mxu0 0.0
        %1502 = vmatpush1.msra.mxu0 %v1493
        %1503 = vmatprep.subr.mxu0 0.0
        %1504 = vmatpush1.msra.mxu0 %v1494
        %1505 = vmatprep.subr.mxu0 0.0
        %1506 = vmatpush1.msra.mxu0 %v1495
        %1507 = vmatprep.subr.mxu0 0.0
        %1508 = vmatpush1.msra.mxu0 0.0
        %1509 = vmatprep.subr.mxu0 0.0
        %1510 = vmatpush1.msra.mxu0 0.0
        %1511 = vmatprep.subr.mxu0 0.0
        %1512 = vmatpush1.msra.mxu0 0.0
        %1513 = vmatprep.subr.mxu0 0.0
        %1514 = vmatpush1.msra.mxu0 0.0
        %1515 = vmatprep.subr.mxu0 0.0
        %1516 = vmatpush1.msra.mxu0 0.0
        %1517 = vmatprep.subr.mxu0 0.0
        %1518 = vmatpush1.msra.mxu0 0.0
        %1519 = vmatprep.subr.mxu0 0.0
        %1520 = vmatpush1.msra.mxu0 0.0
        %1521 = vmatprep.subr.mxu0 0.0
        %1522 = vmatpush1.msra.mxu0 0.0
        %1523 = vmatprep.subr.mxu0 0.0
        %1524 = vmatpush1.msra.mxu0 0.0
        %1525 = vmatprep.subr.mxu0 0.0
        %1526 = vmatpush1.msra.mxu0 0.0
        %1527 = vmatprep.subr.mxu0 0.0
        %1528 = vmatpush1.msra.mxu0 0.0
        %1529 = vmatprep.subr.mxu0 0.0
        %1530 = vmatpush1.msra.mxu0 0.0
        %1531 = vmatprep.subr.mxu0 0.0
        %1532 = vmatpush1.msra.mxu0 0.0
        %1533 = vmatprep.subr.mxu0 0.0
        %1534 = vmatpush1.msra.mxu0 0.0
        %1535 = vmatprep.subr.mxu0 0.0
        %1536 = vmatpush1.msra.mxu0 0.0
        %1537 = vmatprep.subr.mxu0 0.0
        %1538 = vmatpush1.msra.mxu0 0.0
        %1539 = vmatprep.subr.mxu0 0.0
        %1540 = vmatpush1.msra.mxu0 0.0
        %1541 = vmatprep.subr.mxu0 0.0
        %1542 = vmatpush1.msra.mxu0 0.0
        %1543 = vmatprep.subr.mxu0 0.0
        %1544 = vmatpush1.msra.mxu0 0.0
        %1545 = vmatprep.subr.mxu0 0.0
        %1546 = vmatpush1.msra.mxu0 0.0
        %1547 = vmatprep.subr.mxu0 0.0
        %1548 = vmatpush1.msra.mxu0 0.0
        %1549 = vmatprep.subr.mxu0 0.0
        %1550 = vmatpush1.msra.mxu0 0.0
        %1551 = vmatprep.subr.mxu0 0.0
        %1552 = vmatpush1.msra.mxu0 0.0
        %1553 = vmatprep.subr.mxu0 0.0
        %1554 = vmatpush1.msra.mxu0 0.0
        %1555 = vmatprep.subr.mxu0 0.0
        %1556 = vmatpush1.msra.mxu0 0.0
        %1557 = vmatprep.subr.mxu0 0.0
        %1558 = vmatpush1.msra.mxu0 0.0
        %1559 = vmatprep.subr.mxu0 0.0
        %1560 = vmatpush1.msra.mxu0 0.0
        %1561 = vmatprep.subr.mxu0 0.0
        %1562 = vmatpush1.msra.mxu0 0.0
        %1563 = vmatprep.mubr.f32.mxu0 0.0
        %1564 = vmatmul.mubr.f32.gmra.mrb[0].mxu0 %v1497
        %v1565 = vpop.f32.mrb[0].mxu0
        %v1566 = vadd.f32 0.0, %v1565
        %v1567 = vpop.f32.mrb[0].mxu0
        %1568 = vdwg.mxu0
        %1569 = vst.msk [vmem:[%s310] sm:$0xff] %vm316, %v1566
        %s1570 = sand.u32 %s164, 1
        %s1571 = scalar_lea.sflag [#allocation4], %s1570
        %s1572 = sand.u32 %s164, 1
        %s1573 = smul.addr %s1572, 8
        %s1574 = scalar_lea.vmem [#allocation10], %s1573
        // Predicated region
        $region61: #{tpu_custom_call.1} parent=43 // pred_check
          %p1575 = pneg %p174
        $region62: #{tpu_custom_call.1} parent=43 // pred_check_branch
          %1577 = sbr.rel (%p1575) target = $region64
        $region63: #{tpu_custom_call.1} parent=43 // pred_region
          %s1579 = ssub.s32 128, 128
          %1580 = vsyncadd %s1571, %s1579
          %s1581 = smul.addr %s25, 128
          %s1582 = scalar_lea.hbm %s6, %s1581
          %s1584 = sshll.u32 %s1574, 4
          %s1585 = int_to_ptr.vmem [resolvable:$true] %s1584
          %1587 = dma.vmem_to_hbm [thread:$0]  %s1585, 128, %s1582, %s1571
        $region64: #{tpu_custom_call.1} parent=43 // pred_fallthru
          _
      $region44: #{tpu_custom_call.1} parent=5 // pred_fallthru
        _
      %p1588 = scmp.le.s32.totalorder 2, %s20
      // Predicated region
      $region65: #{tpu_custom_call.1} parent=5 // pred_check
        %p1589 = pneg %p1588
      $region66: #{tpu_custom_call.1} parent=5 // pred_check_branch
        %1591 = sbr.rel (%p1589) target = $region68
      $region67: #{tpu_custom_call.1} parent=5 // pred_region
        %s1592 = ssub.s32 %s20, 2
        // Predicated region
        $region69: #{tpu_custom_call.1} parent=67 // pred_check
          %p1593 = pneg %p180
        $region70: #{tpu_custom_call.1} parent=67 // pred_check_branch
          %1595 = sbr.rel (%p1593) target = $region72
        $region71: #{tpu_custom_call.1} parent=67 // pred_region
          %s1596 = sand.u32 %s165, 1
          %s1597 = scalar_lea.sflag [#allocation4], %s1596
          %s1598 = sand.u32 %s165, 1
          %s1599 = smul.addr %s1598, 8
          %s1600 = scalar_lea.vmem [#allocation10], %s1599
          %1601 = dma.done %s1597, 128
        $region72: #{tpu_custom_call.1} parent=67 // pred_fallthru
          _
      $region68: #{tpu_custom_call.1} parent=5 // pred_fallthru
        _
    $region6: #{tpu_custom_call.1} parent=1 // loop_footer
      %s24 = sadd.s32 1, %s20
    $region7: #{tpu_custom_call.1} parent=1 // loop_footer_branch
      %19 = sbr.rel target = $region3
    $region8: #{tpu_custom_call.1} parent=1 // loop_exit
      _
    %1602 = vsyncpa [#allocation3], 1
    %s1603 = scalar_lea.sflag [#allocation3], 1
    %1604 = vsyncpa %s1603, 1
    %1605 = vsyncpa [#allocation6], 1
    %1606 = vsyncpa [#allocation9], 1
    %1607 = vsyncpa [#allocation4], 1
    %s1608 = scalar_lea.sflag [#allocation4], 1
    %1609 = vsyncpa %s1608, 1

</llo_original>
